<compile_context>
chip_gen: v7x
topology: tpu7x:2x2x1
jax: 0.10.0
libtpu: 0.0.40
codegen_flags: <defaults>
</compile_context>

<pallas_src>
import jax
import jax.numpy as jnp
from jax.experimental import pallas as pl
from jax.experimental.pallas import tpu as pltpu

EPS = 1e-5
_TAPS = [(dy, dx) for dy in (-1, 0, 1) for dx in (-1, 0, 1)]


# ---------------------------------------------------------------------------
# Kernel 1: ReLU -> Conv2d(dim, dim, 3, 1, 1) (9 accumulated tap matmuls),
#           y1 stored as bf16, plus packed BN1 partial statistics.
# ---------------------------------------------------------------------------
def _make_conv3x3_kernel(H, W, C, B):
    HW = H * W

    def kernel(x_ref, m_ref, w_ref, y_ref, st_ref):
        # x_ref : (B, C, HW) f32   images, channel-major (lane-dense)
        # m_ref : (9, HW)    f32   0/1 validity mask per tap (zeros the border)
        # w_ref : (9, C, C)  bf16  conv weight per tap, (Cout, Cin)
        # y_ref : (B, C, HW) bf16  conv output (stored bf16)
        # st_ref: (1, 2C, 1) f32   per-block [sum; sum_sq] over images & lanes
        s_tot = jnp.zeros((C, 1), jnp.float32)
        q_tot = jnp.zeros((C, 1), jnp.float32)
        for b in range(B):
            h = jnp.maximum(x_ref[b], 0.0)                       # ReLU #1, f32
            acc = None
            for k, (dy, dx) in enumerate(_TAPS):
                # Tap (dy, dx) of output position j reads input flat position
                # j + dy*W + dx (zero outside the image).  jnp.roll semantics:
                # result[j] = h[(j - shift) mod HW]  =>  shift = -(dy*W+dx).
                shift = (-(dy * W + dx)) % HW
                t = h if shift == 0 else pltpu.roll(h, shift=shift, axis=1)
                if not (dy == 0 and dx == 0):
                    t = t * m_ref[k:k + 1]                       # f32 border mask
                d = jnp.dot(w_ref[k], t.astype(jnp.bfloat16),
                            preferred_element_type=jnp.float32)  # (C, HW) f32
                acc = d if acc is None else acc + d
            y_ref[b] = acc.astype(jnp.bfloat16)                  # bf16 store
            s_tot = s_tot + jnp.sum(acc, axis=1, keepdims=True)  # f32 stats
            q_tot = q_tot + jnp.sum(acc * acc, axis=1, keepdims=True)
        st_ref[0, 0:C] = s_tot
        st_ref[0, C:2 * C] = q_tot

    return kernel


# ---------------------------------------------------------------------------
# Kernel 2: BN1 (folded scale/shift) -> ReLU -> Conv2d(dim, dim, 1),
#           y2 stored as bf16, plus packed BN2 partial statistics.
# ---------------------------------------------------------------------------
def _make_bn_relu_conv1x1_kernel(C, B):
    def kernel(y1_ref, sc_ref, sh_ref, w_ref, y2_ref, st_ref):
        # y1_ref: (B, C, HW) bf16;  sc/sh: (C, 1) f32;  w_ref: (C, C) bf16
        s_tot = jnp.zeros((C, 1), jnp.float32)
        q_tot = jnp.zeros((C, 1), jnp.float32)
        for b in range(B):
            z = jnp.maximum(
                y1_ref[b].astype(jnp.float32) * sc_ref[...] + sh_ref[...], 0.0)
            y = jnp.dot(w_ref[...], z.astype(jnp.bfloat16),
                        preferred_element_type=jnp.float32)       # 1x1 conv
            y2_ref[b] = y.astype(jnp.bfloat16)
            s_tot = s_tot + jnp.sum(y, axis=1, keepdims=True)
            q_tot = q_tot + jnp.sum(y * y, axis=1, keepdims=True)
        st_ref[0, 0:C] = s_tot
        st_ref[0, C:2 * C] = q_tot

    return kernel


# ---------------------------------------------------------------------------
# Kernel 3: BN2 (folded scale/shift) + residual add, lane-dense f32 store.
# ---------------------------------------------------------------------------
def _make_bn_residual_kernel(C, B):
    def kernel(x_ref, y2_ref, sc_ref, sh_ref, o_ref):
        for b in range(B):
            o_ref[b] = (x_ref[b]
                        + y2_ref[b].astype(jnp.float32) * sc_ref[...]
                        + sh_ref[...])

    return kernel


# ---------------------------------------------------------------------------
# Host-side helpers (tiny, run inside the same jit).
# ---------------------------------------------------------------------------
def _tap_masks(H, W):
    """(9, H*W) f32 validity masks (0/1)."""
    hh = jnp.arange(H * W, dtype=jnp.int32) // W
    ww = jnp.arange(H * W, dtype=jnp.int32) % W
    rows = []
    for dy, dx in _TAPS:
        ok = ((hh + dy >= 0) & (hh + dy < H) & (ww + dx >= 0) & (ww + dx < W))
        rows.append(ok.astype(jnp.float32))
    return jnp.stack(rows, axis=0)


def _bn_scale_shift(stats, gamma, beta, count):
    """Fold batch-stat BatchNorm into per-channel (C, 1) scale/shift.
    stats: (G, 2C, 1) with [sum; sum_sq] per grid block."""
    C = gamma.shape[0]
    tot = jnp.sum(stats, axis=0)[:, 0]                   # (2C,)
    mean = tot[:C] / count
    var = tot[C:] / count - mean * mean                  # biased, one-pass
    scale = gamma * jax.lax.rsqrt(var + EPS)
    shift = beta - mean * scale
    return (scale.reshape(C, 1).astype(jnp.float32),
            shift.reshape(C, 1).astype(jnp.float32))


def _images_per_block(N, C, HW, vmem_budget=12 * 1024 * 1024):
    """Images per grid step: as large as the VMEM budget allows (amortizes the
    ~0.35us/step overhead and improves DMA efficiency), while keeping >= 2
    grid steps when N permits (pipeline overlap + v7x 2-TC split).  The 12 MiB
    budget keeps double-buffered blocks well inside v7x's 64 MiB VMEM."""
    per_img = C * HW * 26      # ~bytes/img in K1: 2x f32 in-buf, 2x bf16 out-buf, temps
    b_max = max(1, vmem_budget // per_img)
    divisors = [d for d in range(1, N + 1) if N % d == 0 and d <= b_max] or [1]
    pref = [d for d in divisors if N // d >= 2]
    return max(pref) if pref else max(divisors)


@jax.jit
def resblock_pallas(x_nchw, params):
    """ResBlock forward.  x_nchw: (N, C, H, W) f32.  Params in PyTorch layouts:
    w1 (C, C, 3, 3), b1 (C,), g1 (C,), be1 (C,), w2 (C, C, 1, 1), b2, g2, be2."""
    w1, b1, g1, be1, w2, b2, g2, be2 = params
    del b1, b2   # cancelled exactly by the batch-stats BatchNorm mean subtraction
    N, C, H, W = x_nchw.shape
    HW = H * W
    M = N * HW
    B = _images_per_block(N, C, HW)
    G = N // B

    # Channel-major lane-dense view -- a free reshape, no transpose.
    x = x_nchw.reshape(N, C, HW).astype(jnp.float32)

    # Conv weights: PyTorch (Cout, Cin, kh, kw) -> per-tap (9, Cout, Cin).
    w1t = jnp.transpose(w1, (2, 3, 0, 1)).reshape(9, C, C).astype(jnp.bfloat16)
    w2t = w2.reshape(C, C).astype(jnp.bfloat16)
    masks = _tap_masks(H, W)

    comp = pltpu.CompilerParams(dimension_semantics=("parallel",),
                                vmem_limit_bytes=32 * 1024 * 1024)
    blk3 = lambda g: (g, 0, 0)      # per-image-block
    rep2 = lambda g: (0, 0)         # grid-invariant 2-D operands
    rep3 = lambda g: (0, 0, 0)      # grid-invariant 3-D operands

    # --- K1: ReLU -> 3x3 conv (9 accumulated tap matmuls) + BN1 stats -------
    y1, st1 = pl.pallas_call(
        _make_conv3x3_kernel(H, W, C, B),
        grid=(G,),
        in_specs=[pl.BlockSpec((B, C, HW), blk3),
                  pl.BlockSpec((9, HW), rep2),
                  pl.BlockSpec((9, C, C), rep3)],
        out_specs=[pl.BlockSpec((B, C, HW), blk3),
                   pl.BlockSpec((1, 2 * C, 1), blk3)],
        out_shape=[jax.ShapeDtypeStruct((N, C, HW), jnp.bfloat16),
                   jax.ShapeDtypeStruct((G, 2 * C, 1), jnp.float32)],
        compiler_params=comp,
        cost_estimate=pl.CostEstimate(flops=2 * M * 9 * C * C,
                                      transcendentals=0,
                                      bytes_accessed=6 * M * C),
    )(x, masks, w1t)

    scale1, shift1 = _bn_scale_shift(st1, g1, be1, M)

    # --- K2: BN1 -> ReLU -> 1x1 conv + BN2 stats ------------------------------
    y2, st2 = pl.pallas_call(
        _make_bn_relu_conv1x1_kernel(C, B),
        grid=(G,),
        in_specs=[pl.BlockSpec((B, C, HW), blk3),
                  pl.BlockSpec((C, 1), rep2),
                  pl.BlockSpec((C, 1), rep2),
                  pl.BlockSpec((C, C), rep2)],
        out_specs=[pl.BlockSpec((B, C, HW), blk3),
                   pl.BlockSpec((1, 2 * C, 1), blk3)],
        out_shape=[jax.ShapeDtypeStruct((N, C, HW), jnp.bfloat16),
                   jax.ShapeDtypeStruct((G, 2 * C, 1), jnp.float32)],
        compiler_params=comp,
        cost_estimate=pl.CostEstimate(flops=2 * M * C * C,
                                      transcendentals=0,
                                      bytes_accessed=4 * M * C),
    )(y1, scale1, shift1, w2t)

    scale2, shift2 = _bn_scale_shift(st2, g2, be2, M)

    # --- K3: BN2 + residual (lane-dense f32 output store) ---------------------
    out = pl.pallas_call(
        _make_bn_residual_kernel(C, B),
        grid=(G,),
        in_specs=[pl.BlockSpec((B, C, HW), blk3),
                  pl.BlockSpec((B, C, HW), blk3),
                  pl.BlockSpec((C, 1), rep2),
                  pl.BlockSpec((C, 1), rep2)],
        out_specs=pl.BlockSpec((B, C, HW), blk3),
        out_shape=jax.ShapeDtypeStruct((N, C, HW), jnp.float32),
        compiler_params=comp,
        cost_estimate=pl.CostEstimate(flops=3 * M * C,
                                      transcendentals=0,
                                      bytes_accessed=10 * M * C),
    )(x, y2, scale2, shift2)

    return out.reshape(N, C, H, W)     # free reshape back to NCHW


# ---------------------------------------------------------------------------
# Pure-JAX reference (NCHW), mirrors the PyTorch module in training mode.
#   matmul_dtype : dtype of MXU inputs (kernel uses bf16, f32 accumulation)
#   store_dtype  : emulate the kernel's bf16 storage of the pre-BN activations
#                  (stats computed in f32, BN applied to the rounded values)
# ---------------------------------------------------------------------------
def resblock_ref(x_nchw, params, matmul_dtype=jnp.float32, store_dtype=None):
    w1, b1, g1, be1, w2, b2, g2, be2 = params
    C = x_nchw.shape[1]

    def bn(y, g, b):
        mu = jnp.mean(y, axis=(0, 2, 3), keepdims=True)
        var = jnp.var(y, axis=(0, 2, 3), keepdims=True)          # biased
        if store_dtype is not None:
            y = y.astype(store_dtype).astype(jnp.float32)
        return ((y - mu) * jax.lax.rsqrt(var + EPS) * g[None, :, None, None]
                + b[None, :, None, None])

    h = jax.nn.relu(x_nchw)
    y = jax.lax.conv_general_dilated(
        h.astype(matmul_dtype), w1.astype(matmul_dtype),
        window_strides=(1, 1), padding="SAME",
        dimension_numbers=("NCHW", "OIHW", "NCHW"),
        preferred_element_type=jnp.float32) + b1[None, :, None, None]
    y = jax.nn.relu(bn(y, g1, be1))
    y = jnp.einsum("oc,nchw->nohw",
                   w2.reshape(C, C).astype(matmul_dtype), y.astype(matmul_dtype),
                   preferred_element_type=jnp.float32) + b2[None, :, None, None]
    y = bn(y, g2, be2)
    return x_nchw + y


if __name__ == "__main__":
    key = jax.random.PRNGKey(0)
    N, C, H, W = 2, 32, 16, 16
    ks = jax.random.split(key, 9)

    x = jax.random.normal(ks[0], (N, C, H, W), jnp.float32)

    # Parameters in PyTorch layouts (Conv2d: (Cout, Cin, kh, kw); BN: (C,)).
    w1 = jax.random.normal(ks[1], (C, C, 3, 3), jnp.float32) / (3.0 * jnp.sqrt(C))
    b1 = 0.1 * jax.random.normal(ks[2], (C,), jnp.float32)
    g1 = 1.0 + 0.1 * jax.random.normal(ks[3], (C,), jnp.float32)
    be1 = 0.1 * jax.random.normal(ks[4], (C,), jnp.float32)
    w2 = jax.random.normal(ks[5], (C, C, 1, 1), jnp.float32) / jnp.sqrt(C)
    b2 = 0.1 * jax.random.normal(ks[6], (C,), jnp.float32)
    g2 = 1.0 + 0.1 * jax.random.normal(ks[7], (C,), jnp.float32)
    be2 = 0.1 * jax.random.normal(ks[8], (C,), jnp.float32)
    params = (w1, b1, g1, be1, w2, b2, g2, be2)

    out = resblock_pallas(x, params)
    jax.block_until_ready(out)
    assert out.shape == x.shape and out.dtype == jnp.float32

    # Tight-ish check: reference with bf16 MXU inputs AND bf16 storage of the
    # pre-BN activations (what the kernel actually does); the residual gap is
    # only accumulation order / bias rounding non-commutation.
    ref_bf16 = resblock_ref(x, params, matmul_dtype=jnp.bfloat16,
                            store_dtype=jnp.bfloat16)
    err_bf16 = float(jnp.max(jnp.abs(out - ref_bf16)))
    assert err_bf16 < 5e-2, f"mismatch vs bf16-emulating reference: {err_bf16}"

    # Loose check vs the pure-f32 reference: differences are bf16 MXU inputs
    # and bf16 storage of the (BN-renormalized) intermediates.
    ref_f32 = resblock_ref(x, params, matmul_dtype=jnp.float32)
    err_f32 = float(jnp.max(jnp.abs(out - ref_f32)))
    assert err_f32 < 1e-1, f"mismatch vs f32 reference: {err_f32}"

    print("KERNEL_OK")
</pallas_src>

<mosaic_0001>
module attributes {stable_mosaic.version = 11 : i64} {
  func.func @kernel(%arg0: i32, %arg1: memref<1x32x256xbf16, #tpu.memory_space<vmem>>, %arg2: memref<32x1xf32, #tpu.memory_space<vmem>>, %arg3: memref<32x1xf32, #tpu.memory_space<vmem>>, %arg4: memref<32x32xbf16, #tpu.memory_space<vmem>>, %arg5: memref<1x32x256xbf16, #tpu.memory_space<vmem>>, %arg6: memref<1x64x1xf32, #tpu.memory_space<vmem>>) attributes {dimension_semantics = [#tpu.dimension_semantics<parallel>], iteration_bounds = array<i64: 2>, scalar_prefetch = 0 : i64, scratch_operands = 0 : i64, tpu.core_type = #tpu.core_type<tc>, window_params = [{transform_indices = @transform_0, window_bounds = array<i64: 1, 32, 256>}, {pipeline_mode = #tpu.pipeline_mode<synchronous>, transform_indices = @transform_1, window_bounds = array<i64: 32, 1>}, {pipeline_mode = #tpu.pipeline_mode<synchronous>, transform_indices = @transform_2, window_bounds = array<i64: 32, 1>}, {pipeline_mode = #tpu.pipeline_mode<synchronous>, transform_indices = @transform_3, window_bounds = array<i64: 32, 32>}, {transform_indices = @transform_4, window_bounds = array<i64: 1, 32, 256>}, {transform_indices = @transform_5, window_bounds = array<i64: 1, 64, 1>}]} {
    %cst = arith.constant 0.000000e+00 : f32
    %0 = vector.broadcast %cst : f32 to vector<32x1xf32>
    %cst_0 = arith.constant 0.000000e+00 : f32
    %1 = vector.broadcast %cst_0 : f32 to vector<32x1xf32>
    %c0 = arith.constant 0 : index
    %c0_1 = arith.constant 0 : index
    %c0_2 = arith.constant 0 : index
    %2 = vector.load %arg1[%c0, %c0_1, %c0_2] : memref<1x32x256xbf16, #tpu.memory_space<vmem>>, vector<1x32x256xbf16>
    %3 = vector.shape_cast %2 : vector<1x32x256xbf16> to vector<32x256xbf16>
    %4 = arith.extf %3 : vector<32x256xbf16> to vector<32x256xf32>
    %c0_3 = arith.constant 0 : index
    %c0_4 = arith.constant 0 : index
    %5 = vector.load %arg2[%c0_3, %c0_4] : memref<32x1xf32, #tpu.memory_space<vmem>>, vector<32x1xf32>
    %6 = vector.broadcast %5 : vector<32x1xf32> to vector<32x256xf32>
    %7 = arith.mulf %4, %6 : vector<32x256xf32>
    %c0_5 = arith.constant 0 : index
    %c0_6 = arith.constant 0 : index
    %8 = vector.load %arg3[%c0_5, %c0_6] : memref<32x1xf32, #tpu.memory_space<vmem>>, vector<32x1xf32>
    %9 = vector.broadcast %8 : vector<32x1xf32> to vector<32x256xf32>
    %10 = arith.addf %7, %9 : vector<32x256xf32>
    %cst_7 = arith.constant 0.000000e+00 : f32
    %11 = vector.broadcast %cst_7 : f32 to vector<32x256xf32>
    %12 = arith.maximumf %10, %11 : vector<32x256xf32>
    %c0_8 = arith.constant 0 : index
    %c0_9 = arith.constant 0 : index
    %13 = vector.load %arg4[%c0_8, %c0_9] : memref<32x32xbf16, #tpu.memory_space<vmem>>, vector<32x32xbf16>
    %14 = arith.truncf %12 : vector<32x256xf32> to vector<32x256xbf16>
    %cst_10 = arith.constant dense<0.000000e+00> : vector<32x256xf32>
    %15 = tpu.matmul %13, %14, %cst_10 {dimension_numbers = #tpu.dot_dimension_numbers<[1], [0], [0], [1], [0, 0, 1, 1], [], []>} : vector<32x32xbf16>, vector<32x256xbf16>, vector<32x256xf32> -> vector<32x256xf32>
    %16 = arith.truncf %15 : vector<32x256xf32> to vector<32x256xbf16>
    %c0_11 = arith.constant 0 : index
    %c0_12 = arith.constant 0 : index
    %c0_13 = arith.constant 0 : index
    %17 = vector.load %arg5[%c0_11, %c0_12, %c0_13] : memref<1x32x256xbf16, #tpu.memory_space<vmem>>, vector<1x32x256xbf16>
    %18 = vector.shape_cast %17 : vector<1x32x256xbf16> to vector<32x256xbf16>
    %19 = vector.shape_cast %16 : vector<32x256xbf16> to vector<1x32x256xbf16>
    tpu.vector_store %arg5[%c0_11, %c0_12, %c0_13], %19 {strides = array<i32>} : memref<1x32x256xbf16, #tpu.memory_space<vmem>>, vector<1x32x256xbf16>,
    %cst_14 = arith.constant dense<0.000000e+00> : vector<32xf32>
    %20 = vector.multi_reduction <add>, %15, %cst_14 [1] : vector<32x256xf32> to vector<32xf32>
    %21 = vector.shape_cast %20 : vector<32xf32> to vector<32x1xf32>
    %22 = arith.addf %0, %21 : vector<32x1xf32>
    %23 = arith.mulf %15, %15 : vector<32x256xf32>
    %cst_15 = arith.constant dense<0.000000e+00> : vector<32xf32>
    %24 = vector.multi_reduction <add>, %23, %cst_15 [1] : vector<32x256xf32> to vector<32xf32>
    %25 = vector.shape_cast %24 : vector<32xf32> to vector<32x1xf32>
    %26 = arith.addf %1, %25 : vector<32x1xf32>
    %c0_16 = arith.constant 0 : index
    %c0_17 = arith.constant 0 : index
    %c0_18 = arith.constant 0 : index
    %27 = vector.load %arg6[%c0_16, %c0_17, %c0_18] : memref<1x64x1xf32, #tpu.memory_space<vmem>>, vector<1x32x1xf32>
    %28 = vector.shape_cast %27 : vector<1x32x1xf32> to vector<32x1xf32>
    %29 = vector.shape_cast %22 : vector<32x1xf32> to vector<1x32x1xf32>
    tpu.vector_store %arg6[%c0_16, %c0_17, %c0_18], %29 {strides = array<i32>} : memref<1x64x1xf32, #tpu.memory_space<vmem>>, vector<1x32x1xf32>,
    %c0_19 = arith.constant 0 : index
    %c32 = arith.constant 32 : index
    %c0_20 = arith.constant 0 : index
    %30 = vector.load %arg6[%c0_19, %c32, %c0_20] : memref<1x64x1xf32, #tpu.memory_space<vmem>>, vector<1x32x1xf32>
    %31 = vector.shape_cast %30 : vector<1x32x1xf32> to vector<32x1xf32>
    %32 = vector.shape_cast %26 : vector<32x1xf32> to vector<1x32x1xf32>
    tpu.vector_store %arg6[%c0_19, %c32, %c0_20], %32 {strides = array<i32>} : memref<1x64x1xf32, #tpu.memory_space<vmem>>, vector<1x32x1xf32>,
    return
  }
  func.func @transform_0(%arg0: i32) -> (i32, i32, i32) {
    %c0_i32 = arith.constant 0 : i32
    %c0_i32_0 = arith.constant 0 : i32
    %c0_i32_1 = arith.constant 0 : i32
    return %arg0, %c0_i32, %c0_i32_0 : i32, i32, i32
  }
  func.func @transform_1(%arg0: i32) -> (i32, i32) {
    %c0_i32 = arith.constant 0 : i32
    %c0_i32_0 = arith.constant 0 : i32
    %c0_i32_1 = arith.constant 0 : i32
    return %c0_i32, %c0_i32_0 : i32, i32
  }
  func.func @transform_2(%arg0: i32) -> (i32, i32) {
    %c0_i32 = arith.constant 0 : i32
    %c0_i32_0 = arith.constant 0 : i32
    %c0_i32_1 = arith.constant 0 : i32
    return %c0_i32, %c0_i32_0 : i32, i32
  }
  func.func @transform_3(%arg0: i32) -> (i32, i32) {
    %c0_i32 = arith.constant 0 : i32
    %c0_i32_0 = arith.constant 0 : i32
    %c0_i32_1 = arith.constant 0 : i32
    return %c0_i32, %c0_i32_0 : i32, i32
  }
  func.func @transform_4(%arg0: i32) -> (i32, i32, i32) {
    %c0_i32 = arith.constant 0 : i32
    %c0_i32_0 = arith.constant 0 : i32
    %c0_i32_1 = arith.constant 0 : i32
    return %arg0, %c0_i32, %c0_i32_0 : i32, i32, i32
  }
  func.func @transform_5(%arg0: i32) -> (i32, i32, i32) {
    %c0_i32 = arith.constant 0 : i32
    %c0_i32_0 = arith.constant 0 : i32
    %c0_i32_1 = arith.constant 0 : i32
    return %arg0, %c0_i32, %c0_i32_0 : i32, i32, i32
  }
}

module attributes {stable_mosaic.version = 11 : i64} {
  func.func @kernel(%arg0: i32, %arg1: memref<1x32x256xf32, #tpu.memory_space<vmem>>, %arg2: memref<9x256xf32, #tpu.memory_space<vmem>>, %arg3: memref<9x32x32xbf16, #tpu.memory_space<vmem>>, %arg4: memref<1x32x256xbf16, #tpu.memory_space<vmem>>, %arg5: memref<1x64x1xf32, #tpu.memory_space<vmem>>) attributes {dimension_semantics = [#tpu.dimension_semantics<parallel>], iteration_bounds = array<i64: 2>, scalar_prefetch = 0 : i64, scratch_operands = 0 : i64, tpu.core_type = #tpu.core_type<tc>, window_params = [{transform_indices = @transform_0, window_bounds = array<i64: 1, 32, 256>}, {pipeline_mode = #tpu.pipeline_mode<synchronous>, transform_indices = @transform_1, window_bounds = array<i64: 9, 256>}, {pipeline_mode = #tpu.pipeline_mode<synchronous>, transform_indices = @transform_2, window_bounds = array<i64: 9, 32, 32>}, {transform_indices = @transform_3, window_bounds = array<i64: 1, 32, 256>}, {transform_indices = @transform_4, window_bounds = array<i64: 1, 64, 1>}]} {
    %cst = arith.constant 0.000000e+00 : f32
    %0 = vector.broadcast %cst : f32 to vector<32x1xf32>
    %cst_0 = arith.constant 0.000000e+00 : f32
    %1 = vector.broadcast %cst_0 : f32 to vector<32x1xf32>
    %c0 = arith.constant 0 : index
    %c0_1 = arith.constant 0 : index
    %c0_2 = arith.constant 0 : index
    %2 = vector.load %arg1[%c0, %c0_1, %c0_2] : memref<1x32x256xf32, #tpu.memory_space<vmem>>, vector<1x32x256xf32>
    %3 = vector.shape_cast %2 : vector<1x32x256xf32> to vector<32x256xf32>
    %cst_3 = arith.constant 0.000000e+00 : f32
    %4 = vector.broadcast %cst_3 : f32 to vector<32x256xf32>
    %5 = arith.maximumf %3, %4 : vector<32x256xf32>
    %c17_i32 = arith.constant 17 : i32
    %6 = tpu.dynamic_rotate %5 by %c17_i32 dim 1 : vector<32x256xf32>, i32 -> vector<32x256xf32>
    %c0_4 = arith.constant 0 : index
    %c0_5 = arith.constant 0 : index
    %7 = vector.load %arg2[%c0_4, %c0_5] : memref<9x256xf32, #tpu.memory_space<vmem>>, vector<1x256xf32>
    %8 = vector.broadcast %7 : vector<1x256xf32> to vector<32x256xf32>
    %9 = arith.mulf %6, %8 : vector<32x256xf32>
    %c0_6 = arith.constant 0 : index
    %c0_7 = arith.constant 0 : index
    %c0_8 = arith.constant 0 : index
    %10 = vector.load %arg3[%c0_6, %c0_7, %c0_8] : memref<9x32x32xbf16, #tpu.memory_space<vmem>>, vector<1x32x32xbf16>
    %11 = vector.shape_cast %10 : vector<1x32x32xbf16> to vector<32x32xbf16>
    %12 = arith.truncf %9 : vector<32x256xf32> to vector<32x256xbf16>
    %cst_9 = arith.constant dense<0.000000e+00> : vector<32x256xf32>
    %13 = tpu.matmul %11, %12, %cst_9 {dimension_numbers = #tpu.dot_dimension_numbers<[1], [0], [0], [1], [0, 0, 1, 1], [], []>} : vector<32x32xbf16>, vector<32x256xbf16>, vector<32x256xf32> -> vector<32x256xf32>
    %c16_i32 = arith.constant 16 : i32
    %14 = tpu.dynamic_rotate %5 by %c16_i32 dim 1 : vector<32x256xf32>, i32 -> vector<32x256xf32>
    %c1 = arith.constant 1 : index
    %c0_10 = arith.constant 0 : index
    %15 = vector.load %arg2[%c1, %c0_10] : memref<9x256xf32, #tpu.memory_space<vmem>>, vector<1x256xf32>
    %16 = vector.broadcast %15 : vector<1x256xf32> to vector<32x256xf32>
    %17 = arith.mulf %14, %16 : vector<32x256xf32>
    %c1_11 = arith.constant 1 : index
    %c0_12 = arith.constant 0 : index
    %c0_13 = arith.constant 0 : index
    %18 = vector.load %arg3[%c1_11, %c0_12, %c0_13] : memref<9x32x32xbf16, #tpu.memory_space<vmem>>, vector<1x32x32xbf16>
    %19 = vector.shape_cast %18 : vector<1x32x32xbf16> to vector<32x32xbf16>
    %20 = arith.truncf %17 : vector<32x256xf32> to vector<32x256xbf16>
    %cst_14 = arith.constant dense<0.000000e+00> : vector<32x256xf32>
    %21 = tpu.matmul %19, %20, %cst_14 {dimension_numbers = #tpu.dot_dimension_numbers<[1], [0], [0], [1], [0, 0, 1, 1], [], []>} : vector<32x32xbf16>, vector<32x256xbf16>, vector<32x256xf32> -> vector<32x256xf32>
    %22 = arith.addf %13, %21 : vector<32x256xf32>
    %c15_i32 = arith.constant 15 : i32
    %23 = tpu.dynamic_rotate %5 by %c15_i32 dim 1 : vector<32x256xf32>, i32 -> vector<32x256xf32>
    %c2 = arith.constant 2 : index
    %c0_15 = arith.constant 0 : index
    %24 = vector.load %arg2[%c2, %c0_15] : memref<9x256xf32, #tpu.memory_space<vmem>>, vector<1x256xf32>
    %25 = vector.broadcast %24 : vector<1x256xf32> to vector<32x256xf32>
    %26 = arith.mulf %23, %25 : vector<32x256xf32>
    %c2_16 = arith.constant 2 : index
    %c0_17 = arith.constant 0 : index
    %c0_18 = arith.constant 0 : index
    %27 = vector.load %arg3[%c2_16, %c0_17, %c0_18] : memref<9x32x32xbf16, #tpu.memory_space<vmem>>, vector<1x32x32xbf16>
    %28 = vector.shape_cast %27 : vector<1x32x32xbf16> to vector<32x32xbf16>
    %29 = arith.truncf %26 : vector<32x256xf32> to vector<32x256xbf16>
    %cst_19 = arith.constant dense<0.000000e+00> : vector<32x256xf32>
    %30 = tpu.matmul %28, %29, %cst_19 {dimension_numbers = #tpu.dot_dimension_numbers<[1], [0], [0], [1], [0, 0, 1, 1], [], []>} : vector<32x32xbf16>, vector<32x256xbf16>, vector<32x256xf32> -> vector<32x256xf32>
    %31 = arith.addf %22, %30 : vector<32x256xf32>
    %c1_i32 = arith.constant 1 : i32
    %32 = tpu.dynamic_rotate %5 by %c1_i32 dim 1 : vector<32x256xf32>, i32 -> vector<32x256xf32>
    %c3 = arith.constant 3 : index
    %c0_20 = arith.constant 0 : index
    %33 = vector.load %arg2[%c3, %c0_20] : memref<9x256xf32, #tpu.memory_space<vmem>>, vector<1x256xf32>
    %34 = vector.broadcast %33 : vector<1x256xf32> to vector<32x256xf32>
    %35 = arith.mulf %32, %34 : vector<32x256xf32>
    %c3_21 = arith.constant 3 : index
    %c0_22 = arith.constant 0 : index
    %c0_23 = arith.constant 0 : index
    %36 = vector.load %arg3[%c3_21, %c0_22, %c0_23] : memref<9x32x32xbf16, #tpu.memory_space<vmem>>, vector<1x32x32xbf16>
    %37 = vector.shape_cast %36 : vector<1x32x32xbf16> to vector<32x32xbf16>
    %38 = arith.truncf %35 : vector<32x256xf32> to vector<32x256xbf16>
    %cst_24 = arith.constant dense<0.000000e+00> : vector<32x256xf32>
    %39 = tpu.matmul %37, %38, %cst_24 {dimension_numbers = #tpu.dot_dimension_numbers<[1], [0], [0], [1], [0, 0, 1, 1], [], []>} : vector<32x32xbf16>, vector<32x256xbf16>, vector<32x256xf32> -> vector<32x256xf32>
    %40 = arith.addf %31, %39 : vector<32x256xf32>
    %c4 = arith.constant 4 : index
    %c0_25 = arith.constant 0 : index
    %c0_26 = arith.constant 0 : index
    %41 = vector.load %arg3[%c4, %c0_25, %c0_26] : memref<9x32x32xbf16, #tpu.memory_space<vmem>>, vector<1x32x32xbf16>
    %42 = vector.shape_cast %41 : vector<1x32x32xbf16> to vector<32x32xbf16>
    %43 = arith.truncf %5 : vector<32x256xf32> to vector<32x256xbf16>
    %cst_27 = arith.constant dense<0.000000e+00> : vector<32x256xf32>
    %44 = tpu.matmul %42, %43, %cst_27 {dimension_numbers = #tpu.dot_dimension_numbers<[1], [0], [0], [1], [0, 0, 1, 1], [], []>} : vector<32x32xbf16>, vector<32x256xbf16>, vector<32x256xf32> -> vector<32x256xf32>
    %45 = arith.addf %40, %44 : vector<32x256xf32>
    %c255_i32 = arith.constant 255 : i32
    %46 = tpu.dynamic_rotate %5 by %c255_i32 dim 1 : vector<32x256xf32>, i32 -> vector<32x256xf32>
    %c5 = arith.constant 5 : index
    %c0_28 = arith.constant 0 : index
    %47 = vector.load %arg2[%c5, %c0_28] : memref<9x256xf32, #tpu.memory_space<vmem>>, vector<1x256xf32>
    %48 = vector.broadcast %47 : vector<1x256xf32> to vector<32x256xf32>
    %49 = arith.mulf %46, %48 : vector<32x256xf32>
    %c5_29 = arith.constant 5 : index
    %c0_30 = arith.constant 0 : index
    %c0_31 = arith.constant 0 : index
    %50 = vector.load %arg3[%c5_29, %c0_30, %c0_31] : memref<9x32x32xbf16, #tpu.memory_space<vmem>>, vector<1x32x32xbf16>
    %51 = vector.shape_cast %50 : vector<1x32x32xbf16> to vector<32x32xbf16>
    %52 = arith.truncf %49 : vector<32x256xf32> to vector<32x256xbf16>
    %cst_32 = arith.constant dense<0.000000e+00> : vector<32x256xf32>
    %53 = tpu.matmul %51, %52, %cst_32 {dimension_numbers = #tpu.dot_dimension_numbers<[1], [0], [0], [1], [0, 0, 1, 1], [], []>} : vector<32x32xbf16>, vector<32x256xbf16>, vector<32x256xf32> -> vector<32x256xf32>
    %54 = arith.addf %45, %53 : vector<32x256xf32>
    %c241_i32 = arith.constant 241 : i32
    %55 = tpu.dynamic_rotate %5 by %c241_i32 dim 1 : vector<32x256xf32>, i32 -> vector<32x256xf32>
    %c6 = arith.constant 6 : index
    %c0_33 = arith.constant 0 : index
    %56 = vector.load %arg2[%c6, %c0_33] : memref<9x256xf32, #tpu.memory_space<vmem>>, vector<1x256xf32>
    %57 = vector.broadcast %56 : vector<1x256xf32> to vector<32x256xf32>
    %58 = arith.mulf %55, %57 : vector<32x256xf32>
    %c6_34 = arith.constant 6 : index
    %c0_35 = arith.constant 0 : index
    %c0_36 = arith.constant 0 : index
    %59 = vector.load %arg3[%c6_34, %c0_35, %c0_36] : memref<9x32x32xbf16, #tpu.memory_space<vmem>>, vector<1x32x32xbf16>
    %60 = vector.shape_cast %59 : vector<1x32x32xbf16> to vector<32x32xbf16>
    %61 = arith.truncf %58 : vector<32x256xf32> to vector<32x256xbf16>
    %cst_37 = arith.constant dense<0.000000e+00> : vector<32x256xf32>
    %62 = tpu.matmul %60, %61, %cst_37 {dimension_numbers = #tpu.dot_dimension_numbers<[1], [0], [0], [1], [0, 0, 1, 1], [], []>} : vector<32x32xbf16>, vector<32x256xbf16>, vector<32x256xf32> -> vector<32x256xf32>
    %63 = arith.addf %54, %62 : vector<32x256xf32>
    %c240_i32 = arith.constant 240 : i32
    %64 = tpu.dynamic_rotate %5 by %c240_i32 dim 1 : vector<32x256xf32>, i32 -> vector<32x256xf32>
    %c7 = arith.constant 7 : index
    %c0_38 = arith.constant 0 : index
    %65 = vector.load %arg2[%c7, %c0_38] : memref<9x256xf32, #tpu.memory_space<vmem>>, vector<1x256xf32>
    %66 = vector.broadcast %65 : vector<1x256xf32> to vector<32x256xf32>
    %67 = arith.mulf %64, %66 : vector<32x256xf32>
    %c7_39 = arith.constant 7 : index
    %c0_40 = arith.constant 0 : index
    %c0_41 = arith.constant 0 : index
    %68 = vector.load %arg3[%c7_39, %c0_40, %c0_41] : memref<9x32x32xbf16, #tpu.memory_space<vmem>>, vector<1x32x32xbf16>
    %69 = vector.shape_cast %68 : vector<1x32x32xbf16> to vector<32x32xbf16>
    %70 = arith.truncf %67 : vector<32x256xf32> to vector<32x256xbf16>
    %cst_42 = arith.constant dense<0.000000e+00> : vector<32x256xf32>
    %71 = tpu.matmul %69, %70, %cst_42 {dimension_numbers = #tpu.dot_dimension_numbers<[1], [0], [0], [1], [0, 0, 1, 1], [], []>} : vector<32x32xbf16>, vector<32x256xbf16>, vector<32x256xf32> -> vector<32x256xf32>
    %72 = arith.addf %63, %71 : vector<32x256xf32>
    %c239_i32 = arith.constant 239 : i32
    %73 = tpu.dynamic_rotate %5 by %c239_i32 dim 1 : vector<32x256xf32>, i32 -> vector<32x256xf32>
    %c8 = arith.constant 8 : index
    %c0_43 = arith.constant 0 : index
    %74 = vector.load %arg2[%c8, %c0_43] : memref<9x256xf32, #tpu.memory_space<vmem>>, vector<1x256xf32>
    %75 = vector.broadcast %74 : vector<1x256xf32> to vector<32x256xf32>
    %76 = arith.mulf %73, %75 : vector<32x256xf32>
    %c8_44 = arith.constant 8 : index
    %c0_45 = arith.constant 0 : index
    %c0_46 = arith.constant 0 : index
    %77 = vector.load %arg3[%c8_44, %c0_45, %c0_46] : memref<9x32x32xbf16, #tpu.memory_space<vmem>>, vector<1x32x32xbf16>
    %78 = vector.shape_cast %77 : vector<1x32x32xbf16> to vector<32x32xbf16>
    %79 = arith.truncf %76 : vector<32x256xf32> to vector<32x256xbf16>
    %cst_47 = arith.constant dense<0.000000e+00> : vector<32x256xf32>
    %80 = tpu.matmul %78, %79, %cst_47 {dimension_numbers = #tpu.dot_dimension_numbers<[1], [0], [0], [1], [0, 0, 1, 1], [], []>} : vector<32x32xbf16>, vector<32x256xbf16>, vector<32x256xf32> -> vector<32x256xf32>
    %81 = arith.addf %72, %80 : vector<32x256xf32>
    %82 = arith.truncf %81 : vector<32x256xf32> to vector<32x256xbf16>
    %c0_48 = arith.constant 0 : index
    %c0_49 = arith.constant 0 : index
    %c0_50 = arith.constant 0 : index
    %83 = vector.load %arg4[%c0_48, %c0_49, %c0_50] : memref<1x32x256xbf16, #tpu.memory_space<vmem>>, vector<1x32x256xbf16>
    %84 = vector.shape_cast %83 : vector<1x32x256xbf16> to vector<32x256xbf16>
    %85 = vector.shape_cast %82 : vector<32x256xbf16> to vector<1x32x256xbf16>
    tpu.vector_store %arg4[%c0_48, %c0_49, %c0_50], %85 {strides = array<i32>} : memref<1x32x256xbf16, #tpu.memory_space<vmem>>, vector<1x32x256xbf16>,
    %cst_51 = arith.constant dense<0.000000e+00> : vector<32xf32>
    %86 = vector.multi_reduction <add>, %81, %cst_51 [1] : vector<32x256xf32> to vector<32xf32>
    %87 = vector.shape_cast %86 : vector<32xf32> to vector<32x1xf32>
    %88 = arith.addf %0, %87 : vector<32x1xf32>
    %89 = arith.mulf %81, %81 : vector<32x256xf32>
    %cst_52 = arith.constant dense<0.000000e+00> : vector<32xf32>
    %90 = vector.multi_reduction <add>, %89, %cst_52 [1] : vector<32x256xf32> to vector<32xf32>
    %91 = vector.shape_cast %90 : vector<32xf32> to vector<32x1xf32>
    %92 = arith.addf %1, %91 : vector<32x1xf32>
    %c0_53 = arith.constant 0 : index
    %c0_54 = arith.constant 0 : index
    %c0_55 = arith.constant 0 : index
    %93 = vector.load %arg5[%c0_53, %c0_54, %c0_55] : memref<1x64x1xf32, #tpu.memory_space<vmem>>, vector<1x32x1xf32>
    %94 = vector.shape_cast %93 : vector<1x32x1xf32> to vector<32x1xf32>
    %95 = vector.shape_cast %88 : vector<32x1xf32> to vector<1x32x1xf32>
    tpu.vector_store %arg5[%c0_53, %c0_54, %c0_55], %95 {strides = array<i32>} : memref<1x64x1xf32, #tpu.memory_space<vmem>>, vector<1x32x1xf32>,
    %c0_56 = arith.constant 0 : index
    %c32 = arith.constant 32 : index
    %c0_57 = arith.constant 0 : index
    %96 = vector.load %arg5[%c0_56, %c32, %c0_57] : memref<1x64x1xf32, #tpu.memory_space<vmem>>, vector<1x32x1xf32>
    %97 = vector.shape_cast %96 : vector<1x32x1xf32> to vector<32x1xf32>
    %98 = vector.shape_cast %92 : vector<32x1xf32> to vector<1x32x1xf32>
    tpu.vector_store %arg5[%c0_56, %c32, %c0_57], %98 {strides = array<i32>} : memref<1x64x1xf32, #tpu.memory_space<vmem>>, vector<1x32x1xf32>,
    return
  }
  func.func @transform_0(%arg0: i32) -> (i32, i32, i32) {
    %c0_i32 = arith.constant 0 : i32
    %c0_i32_0 = arith.constant 0 : i32
    %c0_i32_1 = arith.constant 0 : i32
    return %arg0, %c0_i32, %c0_i32_0 : i32, i32, i32
  }
  func.func @transform_1(%arg0: i32) -> (i32, i32) {
    %c0_i32 = arith.constant 0 : i32
    %c0_i32_0 = arith.constant 0 : i32
    %c0_i32_1 = arith.constant 0 : i32
    return %c0_i32, %c0_i32_0 : i32, i32
  }
  func.func @transform_2(%arg0: i32) -> (i32, i32, i32) {
    %c0_i32 = arith.constant 0 : i32
    %c0_i32_0 = arith.constant 0 : i32
    %c0_i32_1 = arith.constant 0 : i32
    %c0_i32_2 = arith.constant 0 : i32
    return %c0_i32, %c0_i32_0, %c0_i32_1 : i32, i32, i32
  }
  func.func @transform_3(%arg0: i32) -> (i32, i32, i32) {
    %c0_i32 = arith.constant 0 : i32
    %c0_i32_0 = arith.constant 0 : i32
    %c0_i32_1 = arith.constant 0 : i32
    return %arg0, %c0_i32, %c0_i32_0 : i32, i32, i32
  }
  func.func @transform_4(%arg0: i32) -> (i32, i32, i32) {
    %c0_i32 = arith.constant 0 : i32
    %c0_i32_0 = arith.constant 0 : i32
    %c0_i32_1 = arith.constant 0 : i32
    return %arg0, %c0_i32, %c0_i32_0 : i32, i32, i32
  }
}

module attributes {stable_mosaic.version = 11 : i64} {
  func.func @kernel(%arg0: i32, %arg1: memref<1x32x256xf32, #tpu.memory_space<vmem>>, %arg2: memref<1x32x256xbf16, #tpu.memory_space<vmem>>, %arg3: memref<32x1xf32, #tpu.memory_space<vmem>>, %arg4: memref<32x1xf32, #tpu.memory_space<vmem>>, %arg5: memref<1x32x256xf32, #tpu.memory_space<vmem>>) attributes {dimension_semantics = [#tpu.dimension_semantics<parallel>], iteration_bounds = array<i64: 2>, scalar_prefetch = 0 : i64, scratch_operands = 0 : i64, tpu.core_type = #tpu.core_type<tc>, window_params = [{transform_indices = @transform_0, window_bounds = array<i64: 1, 32, 256>}, {transform_indices = @transform_1, window_bounds = array<i64: 1, 32, 256>}, {pipeline_mode = #tpu.pipeline_mode<synchronous>, transform_indices = @transform_2, window_bounds = array<i64: 32, 1>}, {pipeline_mode = #tpu.pipeline_mode<synchronous>, transform_indices = @transform_3, window_bounds = array<i64: 32, 1>}, {transform_indices = @transform_4, window_bounds = array<i64: 1, 32, 256>}]} {
    %c0 = arith.constant 0 : index
    %c0_0 = arith.constant 0 : index
    %c0_1 = arith.constant 0 : index
    %0 = vector.load %arg1[%c0, %c0_0, %c0_1] : memref<1x32x256xf32, #tpu.memory_space<vmem>>, vector<1x32x256xf32>
    %1 = vector.shape_cast %0 : vector<1x32x256xf32> to vector<32x256xf32>
    %c0_2 = arith.constant 0 : index
    %c0_3 = arith.constant 0 : index
    %c0_4 = arith.constant 0 : index
    %2 = vector.load %arg2[%c0_2, %c0_3, %c0_4] : memref<1x32x256xbf16, #tpu.memory_space<vmem>>, vector<1x32x256xbf16>
    %3 = vector.shape_cast %2 : vector<1x32x256xbf16> to vector<32x256xbf16>
    %4 = arith.extf %3 : vector<32x256xbf16> to vector<32x256xf32>
    %c0_5 = arith.constant 0 : index
    %c0_6 = arith.constant 0 : index
    %5 = vector.load %arg3[%c0_5, %c0_6] : memref<32x1xf32, #tpu.memory_space<vmem>>, vector<32x1xf32>
    %6 = vector.broadcast %5 : vector<32x1xf32> to vector<32x256xf32>
    %7 = arith.mulf %4, %6 : vector<32x256xf32>
    %8 = arith.addf %1, %7 : vector<32x256xf32>
    %c0_7 = arith.constant 0 : index
    %c0_8 = arith.constant 0 : index
    %9 = vector.load %arg4[%c0_7, %c0_8] : memref<32x1xf32, #tpu.memory_space<vmem>>, vector<32x1xf32>
    %10 = vector.broadcast %9 : vector<32x1xf32> to vector<32x256xf32>
    %11 = arith.addf %8, %10 : vector<32x256xf32>
    %c0_9 = arith.constant 0 : index
    %c0_10 = arith.constant 0 : index
    %c0_11 = arith.constant 0 : index
    %12 = vector.load %arg5[%c0_9, %c0_10, %c0_11] : memref<1x32x256xf32, #tpu.memory_space<vmem>>, vector<1x32x256xf32>
    %13 = vector.shape_cast %12 : vector<1x32x256xf32> to vector<32x256xf32>
    %14 = vector.shape_cast %11 : vector<32x256xf32> to vector<1x32x256xf32>
    tpu.vector_store %arg5[%c0_9, %c0_10, %c0_11], %14 {strides = array<i32>} : memref<1x32x256xf32, #tpu.memory_space<vmem>>, vector<1x32x256xf32>,
    return
  }
  func.func @transform_0(%arg0: i32) -> (i32, i32, i32) {
    %c0_i32 = arith.constant 0 : i32
    %c0_i32_0 = arith.constant 0 : i32
    %c0_i32_1 = arith.constant 0 : i32
    return %arg0, %c0_i32, %c0_i32_0 : i32, i32, i32
  }
  func.func @transform_1(%arg0: i32) -> (i32, i32, i32) {
    %c0_i32 = arith.constant 0 : i32
    %c0_i32_0 = arith.constant 0 : i32
    %c0_i32_1 = arith.constant 0 : i32
    return %arg0, %c0_i32, %c0_i32_0 : i32, i32, i32
  }
  func.func @transform_2(%arg0: i32) -> (i32, i32) {
    %c0_i32 = arith.constant 0 : i32
    %c0_i32_0 = arith.constant 0 : i32
    %c0_i32_1 = arith.constant 0 : i32
    return %c0_i32, %c0_i32_0 : i32, i32
  }
  func.func @transform_3(%arg0: i32) -> (i32, i32) {
    %c0_i32 = arith.constant 0 : i32
    %c0_i32_0 = arith.constant 0 : i32
    %c0_i32_1 = arith.constant 0 : i32
    return %c0_i32, %c0_i32_0 : i32, i32
  }
  func.func @transform_4(%arg0: i32) -> (i32, i32, i32) {
    %c0_i32 = arith.constant 0 : i32
    %c0_i32_0 = arith.constant 0 : i32
    %c0_i32_1 = arith.constant 0 : i32
    return %arg0, %c0_i32, %c0_i32_0 : i32, i32, i32
  }
}

</mosaic_0001>

<llo_original>
// kernel: resblock_pallas.5
$region0: #{resblock_pallas.5}
  #allocation0 [shape = 'u32[]', space=smem, size = 0x4, offset = 0x4, fixed_abs, tag = 'smem constant byte address 0x4 - core index']
  #allocation1 [shape = 'u32[144,128]{1,0:T(1,128)}', space=vmem, size = 0x12000, scoped, tag = 'internal scratch']
  %s0 = inlined_call_operand.vmem [shape: f32[2,32,256], index: 0, kind: input, shape index: {}]
  %s1 = inlined_call_operand.vmem [shape: bf16[2,32,256], index: 1, kind: input, shape index: {}]
  %s2 = inlined_call_operand.vmem [shape: f32[32,1], index: 2, kind: input, shape index: {}]
  %s3 = inlined_call_operand.vmem [shape: f32[32,1], index: 3, kind: input, shape index: {}]
  %s4 = inlined_call_operand.vmem [shape: f32[2,32,256], index: 4, kind: output, shape index: {}]
  %s5 = sld [smem:[#allocation0]]
  $region49: #{resblock_pallas.5} parent=0
    _
  %s7 = ssub.s32 1, %s5
  %s8 = scalar_select 0, %s7, %s5
  loop: start=0, step=1, limit=4
  $region2: #{resblock_pallas.5} parent=0 // loop_pre_header
    _
  $region3: #{resblock_pallas.5} parent=0 // loop_header
    %s10 = sphi 0, %s14
    %p11 = scmp.ge.s32.totalorder %s10, 4
    %s20 = sphi 0, %s22
    %s23 = sphi 0, %s20
    %s24 = sphi 0, %s23
    %s40 = sphi 0, %s24
    %s46 = sphi 0, %s48
    %s49 = sphi 0, %s46
    %s50 = sphi 0, %s49
    %s66 = sphi 0, %s50
    %s70 = sphi 0, %s70
    %s72 = sphi 0, %s70
    %s73 = sphi 0, %s72
    %s87 = sphi 0, %s73
    %s91 = sphi 0, %s91
    %s93 = sphi 0, %s91
    %s94 = sphi 0, %s93
    %s108 = sphi 0, %s94
    %s114 = sphi 0, %s116
    %s117 = sphi 0, %s114
    %s118 = sphi 0, %s117
    %s134 = sphi 0, %s118
  $region4: #{resblock_pallas.5} parent=0 // loop_header_branch
    %13 = sbr.rel (%p11) target = $region8
  $region5: #{resblock_pallas.5} parent=0 // loop_body
    %s15 = ssub.s32 %s10, 1
    %s16 = ssub.s32 %s10, 2
    %s17 = sadd.s32 %s10, 1
    %s18 = ssub.s32 %s10, %s17
    %p19 = scmp.eq.s32.totalorder %s18, 0
    %s21 = sadd.s32 %s20, 1
    %s22 = scalar_select %p19, %s20, %s21
    %p25 = pneg %p19
    %p26 = scmp.eq.s32.totalorder %s10, 1
    %p27 = por %p25, %p26
    %p28 = scmp.ne.s32.totalorder %s20, %s23
    %p29 = scmp.eq.s32.totalorder %s10, 0
    %p30 = por %p28, %p29
    %p31 = scmp.ne.s32.totalorder %s20, %s23
    %p32 = scmp.eq.s32.totalorder %s15, 1
    %p33 = por %p31, %p32
    %p34 = scmp.ne.s32.totalorder %s23, %s24
    %p35 = scmp.eq.s32.totalorder %s15, 0
    %p36 = por %p34, %p35
    %p37 = scmp.ne.s32.totalorder %s23, %s24
    %p38 = scmp.eq.s32.totalorder %s16, 1
    %p39 = por %p37, %p38
    %p41 = scmp.ne.s32.totalorder %s24, %s40
    %p42 = scmp.eq.s32.totalorder %s16, 0
    %p43 = por %p41, %p42
    %s44 = ssub.s32 %s10, %s17
    %p45 = scmp.eq.s32.totalorder %s44, 0
    %s47 = sadd.s32 %s46, 1
    %s48 = scalar_select %p45, %s46, %s47
    %p51 = pneg %p45
    %p52 = scmp.eq.s32.totalorder %s10, 1
    %p53 = por %p51, %p52
    %p54 = scmp.ne.s32.totalorder %s46, %s49
    %p55 = scmp.eq.s32.totalorder %s10, 0
    %p56 = por %p54, %p55
    %p57 = scmp.ne.s32.totalorder %s46, %s49
    %p58 = scmp.eq.s32.totalorder %s15, 1
    %p59 = por %p57, %p58
    %p60 = scmp.ne.s32.totalorder %s49, %s50
    %p61 = scmp.eq.s32.totalorder %s15, 0
    %p62 = por %p60, %p61
    %p63 = scmp.ne.s32.totalorder %s49, %s50
    %p64 = scmp.eq.s32.totalorder %s16, 1
    %p65 = por %p63, %p64
    %p67 = scmp.ne.s32.totalorder %s50, %s66
    %p68 = scmp.eq.s32.totalorder %s16, 0
    %p69 = por %p67, %p68
    %s71 = sadd.s32 %s70, 1
    %p74 = scmp.eq.s32.totalorder %s10, 1
    %p75 = scmp.ne.s32.totalorder %s70, %s72
    %p76 = scmp.eq.s32.totalorder %s10, 0
    %p77 = por %p75, %p76
    %p78 = scmp.ne.s32.totalorder %s70, %s72
    %p79 = scmp.eq.s32.totalorder %s15, 1
    %p80 = por %p78, %p79
    %p81 = scmp.ne.s32.totalorder %s72, %s73
    %p82 = scmp.eq.s32.totalorder %s15, 0
    %p83 = por %p81, %p82
    %p84 = scmp.ne.s32.totalorder %s72, %s73
    %p85 = scmp.eq.s32.totalorder %s16, 1
    %p86 = por %p84, %p85
    %p88 = scmp.ne.s32.totalorder %s73, %s87
    %p89 = scmp.eq.s32.totalorder %s16, 0
    %p90 = por %p88, %p89
    %s92 = sadd.s32 %s91, 1
    %p95 = scmp.eq.s32.totalorder %s10, 1
    %p96 = scmp.ne.s32.totalorder %s91, %s93
    %p97 = scmp.eq.s32.totalorder %s10, 0
    %p98 = por %p96, %p97
    %p99 = scmp.ne.s32.totalorder %s91, %s93
    %p100 = scmp.eq.s32.totalorder %s15, 1
    %p101 = por %p99, %p100
    %p102 = scmp.ne.s32.totalorder %s93, %s94
    %p103 = scmp.eq.s32.totalorder %s15, 0
    %p104 = por %p102, %p103
    %p105 = scmp.ne.s32.totalorder %s93, %s94
    %p106 = scmp.eq.s32.totalorder %s16, 1
    %p107 = por %p105, %p106
    %p109 = scmp.ne.s32.totalorder %s94, %s108
    %p110 = scmp.eq.s32.totalorder %s16, 0
    %p111 = por %p109, %p110
    %s112 = ssub.s32 %s10, %s17
    %p113 = scmp.eq.s32.totalorder %s112, 0
    %s115 = sadd.s32 %s114, 1
    %s116 = scalar_select %p113, %s114, %s115
    %p119 = pneg %p113
    %p120 = scmp.eq.s32.totalorder %s10, 1
    %p121 = por %p119, %p120
    %p122 = scmp.ne.s32.totalorder %s114, %s117
    %p123 = scmp.eq.s32.totalorder %s10, 0
    %p124 = por %p122, %p123
    %p125 = scmp.ne.s32.totalorder %s114, %s117
    %p126 = scmp.eq.s32.totalorder %s15, 1
    %p127 = por %p125, %p126
    %p128 = scmp.ne.s32.totalorder %s117, %s118
    %p129 = scmp.eq.s32.totalorder %s15, 0
    %p130 = por %p128, %p129
    %p131 = scmp.ne.s32.totalorder %s117, %s118
    %p132 = scmp.eq.s32.totalorder %s16, 1
    %p133 = por %p131, %p132
    %p135 = scmp.ne.s32.totalorder %s118, %s134
    %p136 = scmp.eq.s32.totalorder %s16, 0
    %p137 = por %p135, %p136
    %p138 = scmp.le.s32.totalorder 1, %s10
    %p139 = scmp.lt.s32.totalorder %s10, 3
    %p140 = pnand %p138, %p139
    %p141 = pneg %p140
    // Predicated region
    $region9: #{resblock_pallas.5} parent=5 // pred_check
      _
    $region10: #{resblock_pallas.5} parent=5 // pred_check_branch
      %143 = sbr.rel (%p140) target = $region12
    $region11: #{resblock_pallas.5} parent=5 // pred_region
      %s144 = ssub.s32 %s10, 1
      // Predicated region
      $region13: #{resblock_pallas.5} parent=11 // pred_check
        %p145 = pneg %p83
      $region14: #{resblock_pallas.5} parent=11 // pred_check_branch
        %147 = sbr.rel (%p145) target = $region16
      $region15: #{resblock_pallas.5} parent=11 // pred_region
        _
      $region16: #{resblock_pallas.5} parent=11 // pred_fallthru
        _
      // Predicated region
      $region17: #{resblock_pallas.5} parent=11 // pred_check
        %p148 = pneg %p104
      $region18: #{resblock_pallas.5} parent=11 // pred_check_branch
        %150 = sbr.rel (%p148) target = $region20
      $region19: #{resblock_pallas.5} parent=11 // pred_region
        _
      $region20: #{resblock_pallas.5} parent=11 // pred_fallthru
        _
    $region12: #{resblock_pallas.5} parent=5 // pred_fallthru
      _
    %p151 = scmp.lt.s32.totalorder %s10, 2
    // Predicated region
    $region21: #{resblock_pallas.5} parent=5 // pred_check
      %p152 = pneg %p151
    $region22: #{resblock_pallas.5} parent=5 // pred_check_branch
      %154 = sbr.rel (%p152) target = $region24
    $region23: #{resblock_pallas.5} parent=5 // pred_region
      // Predicated region
      $region25: #{resblock_pallas.5} parent=23 // pred_check
        %p155 = pneg %p30
      $region26: #{resblock_pallas.5} parent=23 // pred_check_branch
        %157 = sbr.rel (%p155) target = $region28
      $region27: #{resblock_pallas.5} parent=23 // pred_region
        %p158 = scmp.lt.s32.totalorder %s10, 1
        %s159 = scalar_select %p158, %s10, 1
        %s160 = smul.addr %s159, 8
        %s161 = smul.addr %s160, 8
        %s162 = scalar_lea.vmem %s0, %s161
      $region28: #{resblock_pallas.5} parent=23 // pred_fallthru
        _
      // Predicated region
      $region29: #{resblock_pallas.5} parent=23 // pred_check
        %p163 = pneg %p56
      $region30: #{resblock_pallas.5} parent=23 // pred_check_branch
        %165 = sbr.rel (%p163) target = $region32
      $region31: #{resblock_pallas.5} parent=23 // pred_region
        %p166 = scmp.lt.s32.totalorder %s10, 1
        %s167 = scalar_select %p166, %s10, 1
        %s168 = smul.addr %s167, 8
        %s169 = smul.addr %s168, 4
        %s170 = scalar_lea.vmem %s1, %s169
      $region32: #{resblock_pallas.5} parent=23 // pred_fallthru
        _
    $region24: #{resblock_pallas.5} parent=5 // pred_fallthru
      _
    %p171 = scmp.le.s32.totalorder 1, %s10
    %p172 = scmp.lt.s32.totalorder %s10, 3
    %p173 = pnand %p171, %p172
    %p174 = pneg %p173
    // Predicated region
    $region33: #{resblock_pallas.5} parent=5 // pred_check
      _
    $region34: #{resblock_pallas.5} parent=5 // pred_check_branch
      %176 = sbr.rel (%p173) target = $region36
    $region35: #{resblock_pallas.5} parent=5 // pred_region
      %s177 = ssub.s32 %s10, 1
      %p178 = scmp.lt.s32.totalorder %s15, 1
      %s179 = scalar_select %p178, %s15, 1
      %s180 = smul.addr %s179, 8
      %s181 = smul.addr %s180, 8
      %s182 = scalar_lea.vmem %s0, %s181
      %p183 = pneg %p36
      %p184 = pneg %p33
      %p185 = scmp.lt.s32.totalorder %s15, 1
      %s186 = scalar_select %p185, %s15, 1
      %s187 = smul.addr %s186, 8
      %s188 = smul.addr %s187, 4
      %s189 = scalar_lea.vmem %s1, %s188
      %p190 = pneg %p62
      %p191 = pneg %p59
      %p192 = pneg %p83
      %p193 = pneg %p80
      %p194 = pneg %p104
      %p195 = pneg %p101
      %p196 = pneg %p130
      %p197 = pneg %p127
      %p198 = scmp.lt.s32.totalorder %s15, 1
      %s199 = scalar_select %p198, %s15, 1
      %s200 = smul.addr %s199, 8
      %s201 = smul.addr %s200, 8
      %s202 = scalar_lea.vmem %s4, %s201
      %p203 = scmp.lt.s32.totalorder %s15, 1
      %s204 = scalar_select %p203, %s15, 1
      %s205 = smul.addr %s204, 8
      %s206 = smul.addr %s205, 8
      %s207 = scalar_lea.vmem %s0, %s206
      %p208 = scmp.lt.s32.totalorder %s15, 1
      %s209 = scalar_select %p208, %s15, 1
      %s210 = smul.addr %s209, 8
      %s211 = smul.addr %s210, 4
      %s212 = scalar_lea.vmem %s1, %s211
      %p213 = scmp.lt.s32.totalorder %s15, 1
      %s214 = scalar_select %p213, %s15, 1
      %s215 = smul.addr %s214, 8
      %s216 = smul.addr %s215, 8
      %s217 = scalar_lea.vmem %s4, %s216
      %v218 = vld [vmem:[%s207] sm:$0xff]
      %v219 = vld [vmem:[%s207 + $0x8] sm:$0xff]
      %v220 = vld [vmem:[%s207 + $0x10] sm:$0xff]
      %v221 = vld [vmem:[%s207 + $0x18] sm:$0xff]
      %v222 = vld [vmem:[%s207 + $0x20] sm:$0xff]
      %v223 = vld [vmem:[%s207 + $0x28] sm:$0xff]
      %v224 = vld [vmem:[%s207 + $0x30] sm:$0xff]
      %v225 = vld [vmem:[%s207 + $0x38] sm:$0xff]
      %v226 = vld [vmem:[%s212] sm:$0xff]
      %v227 = vld [vmem:[%s212 + $0x8] sm:$0xff]
      %v228 = vld [vmem:[%s212 + $0x10] sm:$0xff]
      %v229 = vld [vmem:[%s212 + $0x18] sm:$0xff]
      %v230 = vunpack.c.l.bf16 %v226
      %v231 = vunpack.c.h.bf16 %v226
      %v232 = vunpack.c.l.bf16 %v227
      %v233 = vunpack.c.h.bf16 %v227
      %v234 = vunpack.c.l.bf16 %v228
      %v235 = vunpack.c.h.bf16 %v228
      %v236 = vunpack.c.l.bf16 %v229
      %v237 = vunpack.c.h.bf16 %v229
      %v238 = vld [vmem:[%s2] sm:$0xff]
      %v239 = vld [vmem:[%s2 + $0x8] sm:$0xff]
      %v240 = vld [vmem:[%s2 + $0x10] sm:$0xff]
      %v241 = vld [vmem:[%s2 + $0x18] sm:$0xff]
      %243 = vset.pattern.permute.xlu0 0
      %244 = vperm.xlu0 %243, %v238
      %v245 = vpop.permute.xlu0 %244
      %248 = vset.pattern.permute.xlu0 0
      %249 = vperm.xlu0 %248, %v239
      %v250 = vpop.permute.xlu0 %249
      %253 = vset.pattern.permute.xlu0 0
      %254 = vperm.xlu0 %253, %v240
      %v255 = vpop.permute.xlu0 %254
      %258 = vset.pattern.permute.xlu0 0
      %259 = vperm.xlu0 %258, %v241
      %v260 = vpop.permute.xlu0 %259
      %v262 = vmul.f32 %v230, %v245
      %v263 = vmul.f32 %v231, %v245
      %v264 = vmul.f32 %v232, %v250
      %v265 = vmul.f32 %v233, %v250
      %v266 = vmul.f32 %v234, %v255
      %v267 = vmul.f32 %v235, %v255
      %v268 = vmul.f32 %v236, %v260
      %v269 = vmul.f32 %v237, %v260
      %v270 = vadd.f32 %v218, %v262
      %v271 = vadd.f32 %v219, %v263
      %v272 = vadd.f32 %v220, %v264
      %v273 = vadd.f32 %v221, %v265
      %v274 = vadd.f32 %v222, %v266
      %v275 = vadd.f32 %v223, %v267
      %v276 = vadd.f32 %v224, %v268
      %v277 = vadd.f32 %v225, %v269
      %v278 = vld [vmem:[%s3] sm:$0xff]
      %v279 = vld [vmem:[%s3 + $0x8] sm:$0xff]
      %v280 = vld [vmem:[%s3 + $0x10] sm:$0xff]
      %v281 = vld [vmem:[%s3 + $0x18] sm:$0xff]
      %283 = vset.pattern.permute.xlu0 0
      %284 = vperm.xlu0 %283, %v278
      %v285 = vpop.permute.xlu0 %284
      %288 = vset.pattern.permute.xlu0 0
      %289 = vperm.xlu0 %288, %v279
      %v290 = vpop.permute.xlu0 %289
      %293 = vset.pattern.permute.xlu0 0
      %294 = vperm.xlu0 %293, %v280
      %v295 = vpop.permute.xlu0 %294
      %298 = vset.pattern.permute.xlu0 0
      %299 = vperm.xlu0 %298, %v281
      %v300 = vpop.permute.xlu0 %299
      %v302 = vadd.f32 %v270, %v285
      %v303 = vadd.f32 %v271, %v285
      %v304 = vadd.f32 %v272, %v290
      %v305 = vadd.f32 %v273, %v290
      %v306 = vadd.f32 %v274, %v295
      %v307 = vadd.f32 %v275, %v295
      %v308 = vadd.f32 %v276, %v300
      %v309 = vadd.f32 %v277, %v300
      %310 = vst [vmem:[%s217] sm:$0xff] %v302
      %311 = vst [vmem:[%s217 + $0x8] sm:$0xff] %v303
      %312 = vst [vmem:[%s217 + $0x10] sm:$0xff] %v304
      %313 = vst [vmem:[%s217 + $0x18] sm:$0xff] %v305
      %314 = vst [vmem:[%s217 + $0x20] sm:$0xff] %v306
      %315 = vst [vmem:[%s217 + $0x28] sm:$0xff] %v307
      %316 = vst [vmem:[%s217 + $0x30] sm:$0xff] %v308
      %317 = vst [vmem:[%s217 + $0x38] sm:$0xff] %v309
      %p318 = scmp.lt.s32.totalorder %s15, 1
      %s319 = scalar_select %p318, %s15, 1
      %s320 = smul.addr %s319, 8
      %s321 = smul.addr %s320, 8
      %s322 = scalar_lea.vmem %s4, %s321
      // Predicated region
      $region37: #{resblock_pallas.5} parent=35 // pred_check
        %p323 = pneg %p127
      $region38: #{resblock_pallas.5} parent=35 // pred_check_branch
        %325 = sbr.rel (%p323) target = $region40
      $region39: #{resblock_pallas.5} parent=35 // pred_region
        _
      $region40: #{resblock_pallas.5} parent=35 // pred_fallthru
        _
    $region36: #{resblock_pallas.5} parent=5 // pred_fallthru
      _
    %p326 = scmp.le.s32.totalorder 2, %s10
    // Predicated region
    $region41: #{resblock_pallas.5} parent=5 // pred_check
      %p327 = pneg %p326
    $region42: #{resblock_pallas.5} parent=5 // pred_check_branch
      %329 = sbr.rel (%p327) target = $region44
    $region43: #{resblock_pallas.5} parent=5 // pred_region
      %s330 = ssub.s32 %s10, 2
      // Predicated region
      $region45: #{resblock_pallas.5} parent=43 // pred_check
        %p331 = pneg %p133
      $region46: #{resblock_pallas.5} parent=43 // pred_check_branch
        %333 = sbr.rel (%p331) target = $region48
      $region47: #{resblock_pallas.5} parent=43 // pred_region
        %p334 = scmp.lt.s32.totalorder %s16, 1
        %s335 = scalar_select %p334, %s16, 1
        %s336 = smul.addr %s335, 8
        %s337 = smul.addr %s336, 8
        %s338 = scalar_lea.vmem %s4, %s337
      $region48: #{resblock_pallas.5} parent=43 // pred_fallthru
        _
    $region44: #{resblock_pallas.5} parent=5 // pred_fallthru
      _
  $region6: #{resblock_pallas.5} parent=0 // loop_footer
    %s14 = sadd.s32 1, %s10
  $region7: #{resblock_pallas.5} parent=0 // loop_footer_branch
    %9 = sbr.rel target = $region3
  $region8: #{resblock_pallas.5} parent=0 // loop_exit
    _

// kernel: resblock_pallas.4
$region0: #{resblock_pallas.4}
  #allocation0 [shape = 'u32[]', space=smem, size = 0x4, offset = 0x4, fixed_abs, tag = 'smem constant byte address 0x4 - core index']
  #allocation1 [shape = 'u32[144,128]{1,0:T(1,128)}', space=vmem, size = 0x12000, scoped, tag = 'internal scratch']
  %s0 = inlined_call_operand.vmem [shape: bf16[2,32,256], index: 0, kind: input, shape index: {}]
  %s1 = inlined_call_operand.vmem [shape: f32[32,1], index: 1, kind: input, shape index: {}]
  %s2 = inlined_call_operand.vmem [shape: f32[32,1], index: 2, kind: input, shape index: {}]
  %s3 = inlined_call_operand.vmem [shape: bf16[32,32], index: 3, kind: input, shape index: {}]
  %s4 = inlined_call_operand.vmem [shape: bf16[2,32,256], index: 4, kind: output, shape index: {0}]
  %s5 = inlined_call_operand.vmem [shape: f32[2,64,1], index: 5, kind: output, shape index: {1}]
  %6 = xla_tuple %s4, %s5
  %s7 = sld [smem:[#allocation0]]
  $region57: #{resblock_pallas.4} parent=0
    _
  %s9 = ssub.s32 1, %s7
  %s10 = scalar_select 0, %s9, %s7
  loop: start=0, step=1, limit=4
  $region2: #{resblock_pallas.4} parent=0 // loop_pre_header
    _
  $region3: #{resblock_pallas.4} parent=0 // loop_header
    %s12 = sphi 0, %s16
    %p13 = scmp.ge.s32.totalorder %s12, 4
    %s22 = sphi 0, %s24
    %s25 = sphi 0, %s22
    %s26 = sphi 0, %s25
    %s42 = sphi 0, %s26
    %s46 = sphi 0, %s46
    %s48 = sphi 0, %s46
    %s49 = sphi 0, %s48
    %s63 = sphi 0, %s49
    %s67 = sphi 0, %s67
    %s69 = sphi 0, %s67
    %s70 = sphi 0, %s69
    %s84 = sphi 0, %s70
    %s88 = sphi 0, %s88
    %s90 = sphi 0, %s88
    %s91 = sphi 0, %s90
    %s105 = sphi 0, %s91
    %s111 = sphi 0, %s113
    %s114 = sphi 0, %s111
    %s115 = sphi 0, %s114
    %s131 = sphi 0, %s115
    %s137 = sphi 0, %s139
    %s140 = sphi 0, %s137
    %s141 = sphi 0, %s140
    %s157 = sphi 0, %s141
  $region4: #{resblock_pallas.4} parent=0 // loop_header_branch
    %15 = sbr.rel (%p13) target = $region8
  $region5: #{resblock_pallas.4} parent=0 // loop_body
    %s17 = ssub.s32 %s12, 1
    %s18 = ssub.s32 %s12, 2
    %s19 = sadd.s32 %s12, 1
    %s20 = ssub.s32 %s12, %s19
    %p21 = scmp.eq.s32.totalorder %s20, 0
    %s23 = sadd.s32 %s22, 1
    %s24 = scalar_select %p21, %s22, %s23
    %p27 = pneg %p21
    %p28 = scmp.eq.s32.totalorder %s12, 1
    %p29 = por %p27, %p28
    %p30 = scmp.ne.s32.totalorder %s22, %s25
    %p31 = scmp.eq.s32.totalorder %s12, 0
    %p32 = por %p30, %p31
    %p33 = scmp.ne.s32.totalorder %s22, %s25
    %p34 = scmp.eq.s32.totalorder %s17, 1
    %p35 = por %p33, %p34
    %p36 = scmp.ne.s32.totalorder %s25, %s26
    %p37 = scmp.eq.s32.totalorder %s17, 0
    %p38 = por %p36, %p37
    %p39 = scmp.ne.s32.totalorder %s25, %s26
    %p40 = scmp.eq.s32.totalorder %s18, 1
    %p41 = por %p39, %p40
    %p43 = scmp.ne.s32.totalorder %s26, %s42
    %p44 = scmp.eq.s32.totalorder %s18, 0
    %p45 = por %p43, %p44
    %s47 = sadd.s32 %s46, 1
    %p50 = scmp.eq.s32.totalorder %s12, 1
    %p51 = scmp.ne.s32.totalorder %s46, %s48
    %p52 = scmp.eq.s32.totalorder %s12, 0
    %p53 = por %p51, %p52
    %p54 = scmp.ne.s32.totalorder %s46, %s48
    %p55 = scmp.eq.s32.totalorder %s17, 1
    %p56 = por %p54, %p55
    %p57 = scmp.ne.s32.totalorder %s48, %s49
    %p58 = scmp.eq.s32.totalorder %s17, 0
    %p59 = por %p57, %p58
    %p60 = scmp.ne.s32.totalorder %s48, %s49
    %p61 = scmp.eq.s32.totalorder %s18, 1
    %p62 = por %p60, %p61
    %p64 = scmp.ne.s32.totalorder %s49, %s63
    %p65 = scmp.eq.s32.totalorder %s18, 0
    %p66 = por %p64, %p65
    %s68 = sadd.s32 %s67, 1
    %p71 = scmp.eq.s32.totalorder %s12, 1
    %p72 = scmp.ne.s32.totalorder %s67, %s69
    %p73 = scmp.eq.s32.totalorder %s12, 0
    %p74 = por %p72, %p73
    %p75 = scmp.ne.s32.totalorder %s67, %s69
    %p76 = scmp.eq.s32.totalorder %s17, 1
    %p77 = por %p75, %p76
    %p78 = scmp.ne.s32.totalorder %s69, %s70
    %p79 = scmp.eq.s32.totalorder %s17, 0
    %p80 = por %p78, %p79
    %p81 = scmp.ne.s32.totalorder %s69, %s70
    %p82 = scmp.eq.s32.totalorder %s18, 1
    %p83 = por %p81, %p82
    %p85 = scmp.ne.s32.totalorder %s70, %s84
    %p86 = scmp.eq.s32.totalorder %s18, 0
    %p87 = por %p85, %p86
    %s89 = sadd.s32 %s88, 1
    %p92 = scmp.eq.s32.totalorder %s12, 1
    %p93 = scmp.ne.s32.totalorder %s88, %s90
    %p94 = scmp.eq.s32.totalorder %s12, 0
    %p95 = por %p93, %p94
    %p96 = scmp.ne.s32.totalorder %s88, %s90
    %p97 = scmp.eq.s32.totalorder %s17, 1
    %p98 = por %p96, %p97
    %p99 = scmp.ne.s32.totalorder %s90, %s91
    %p100 = scmp.eq.s32.totalorder %s17, 0
    %p101 = por %p99, %p100
    %p102 = scmp.ne.s32.totalorder %s90, %s91
    %p103 = scmp.eq.s32.totalorder %s18, 1
    %p104 = por %p102, %p103
    %p106 = scmp.ne.s32.totalorder %s91, %s105
    %p107 = scmp.eq.s32.totalorder %s18, 0
    %p108 = por %p106, %p107
    %s109 = ssub.s32 %s12, %s19
    %p110 = scmp.eq.s32.totalorder %s109, 0
    %s112 = sadd.s32 %s111, 1
    %s113 = scalar_select %p110, %s111, %s112
    %p116 = pneg %p110
    %p117 = scmp.eq.s32.totalorder %s12, 1
    %p118 = por %p116, %p117
    %p119 = scmp.ne.s32.totalorder %s111, %s114
    %p120 = scmp.eq.s32.totalorder %s12, 0
    %p121 = por %p119, %p120
    %p122 = scmp.ne.s32.totalorder %s111, %s114
    %p123 = scmp.eq.s32.totalorder %s17, 1
    %p124 = por %p122, %p123
    %p125 = scmp.ne.s32.totalorder %s114, %s115
    %p126 = scmp.eq.s32.totalorder %s17, 0
    %p127 = por %p125, %p126
    %p128 = scmp.ne.s32.totalorder %s114, %s115
    %p129 = scmp.eq.s32.totalorder %s18, 1
    %p130 = por %p128, %p129
    %p132 = scmp.ne.s32.totalorder %s115, %s131
    %p133 = scmp.eq.s32.totalorder %s18, 0
    %p134 = por %p132, %p133
    %s135 = ssub.s32 %s12, %s19
    %p136 = scmp.eq.s32.totalorder %s135, 0
    %s138 = sadd.s32 %s137, 1
    %s139 = scalar_select %p136, %s137, %s138
    %p142 = pneg %p136
    %p143 = scmp.eq.s32.totalorder %s12, 1
    %p144 = por %p142, %p143
    %p145 = scmp.ne.s32.totalorder %s137, %s140
    %p146 = scmp.eq.s32.totalorder %s12, 0
    %p147 = por %p145, %p146
    %p148 = scmp.ne.s32.totalorder %s137, %s140
    %p149 = scmp.eq.s32.totalorder %s17, 1
    %p150 = por %p148, %p149
    %p151 = scmp.ne.s32.totalorder %s140, %s141
    %p152 = scmp.eq.s32.totalorder %s17, 0
    %p153 = por %p151, %p152
    %p154 = scmp.ne.s32.totalorder %s140, %s141
    %p155 = scmp.eq.s32.totalorder %s18, 1
    %p156 = por %p154, %p155
    %p158 = scmp.ne.s32.totalorder %s141, %s157
    %p159 = scmp.eq.s32.totalorder %s18, 0
    %p160 = por %p158, %p159
    %p161 = scmp.le.s32.totalorder 1, %s12
    %p162 = scmp.lt.s32.totalorder %s12, 3
    %p163 = pnand %p161, %p162
    %p164 = pneg %p163
    // Predicated region
    $region9: #{resblock_pallas.4} parent=5 // pred_check
      _
    $region10: #{resblock_pallas.4} parent=5 // pred_check_branch
      %166 = sbr.rel (%p163) target = $region12
    $region11: #{resblock_pallas.4} parent=5 // pred_region
      %s167 = ssub.s32 %s12, 1
      // Predicated region
      $region13: #{resblock_pallas.4} parent=11 // pred_check
        %p168 = pneg %p59
      $region14: #{resblock_pallas.4} parent=11 // pred_check_branch
        %170 = sbr.rel (%p168) target = $region16
      $region15: #{resblock_pallas.4} parent=11 // pred_region
        _
      $region16: #{resblock_pallas.4} parent=11 // pred_fallthru
        _
      // Predicated region
      $region17: #{resblock_pallas.4} parent=11 // pred_check
        %p171 = pneg %p80
      $region18: #{resblock_pallas.4} parent=11 // pred_check_branch
        %173 = sbr.rel (%p171) target = $region20
      $region19: #{resblock_pallas.4} parent=11 // pred_region
        _
      $region20: #{resblock_pallas.4} parent=11 // pred_fallthru
        _
      // Predicated region
      $region21: #{resblock_pallas.4} parent=11 // pred_check
        %p174 = pneg %p101
      $region22: #{resblock_pallas.4} parent=11 // pred_check_branch
        %176 = sbr.rel (%p174) target = $region24
      $region23: #{resblock_pallas.4} parent=11 // pred_region
        _
      $region24: #{resblock_pallas.4} parent=11 // pred_fallthru
        _
    $region12: #{resblock_pallas.4} parent=5 // pred_fallthru
      _
    %p177 = scmp.lt.s32.totalorder %s12, 2
    // Predicated region
    $region25: #{resblock_pallas.4} parent=5 // pred_check
      %p178 = pneg %p177
    $region26: #{resblock_pallas.4} parent=5 // pred_check_branch
      %180 = sbr.rel (%p178) target = $region28
    $region27: #{resblock_pallas.4} parent=5 // pred_region
      // Predicated region
      $region29: #{resblock_pallas.4} parent=27 // pred_check
        %p181 = pneg %p32
      $region30: #{resblock_pallas.4} parent=27 // pred_check_branch
        %183 = sbr.rel (%p181) target = $region32
      $region31: #{resblock_pallas.4} parent=27 // pred_region
        %p184 = scmp.lt.s32.totalorder %s12, 1
        %s185 = scalar_select %p184, %s12, 1
        %s186 = smul.addr %s185, 8
        %s187 = smul.addr %s186, 4
        %s188 = scalar_lea.vmem %s0, %s187
      $region32: #{resblock_pallas.4} parent=27 // pred_fallthru
        _
    $region28: #{resblock_pallas.4} parent=5 // pred_fallthru
      _
    %p189 = scmp.le.s32.totalorder 1, %s12
    %p190 = scmp.lt.s32.totalorder %s12, 3
    %p191 = pnand %p189, %p190
    %p192 = pneg %p191
    // Predicated region
    $region33: #{resblock_pallas.4} parent=5 // pred_check
      _
    $region34: #{resblock_pallas.4} parent=5 // pred_check_branch
      %194 = sbr.rel (%p191) target = $region36
    $region35: #{resblock_pallas.4} parent=5 // pred_region
      %s195 = ssub.s32 %s12, 1
      %p196 = scmp.lt.s32.totalorder %s17, 1
      %s197 = scalar_select %p196, %s17, 1
      %s198 = smul.addr %s197, 8
      %s199 = smul.addr %s198, 4
      %s200 = scalar_lea.vmem %s0, %s199
      %p201 = pneg %p38
      %p202 = pneg %p35
      %p203 = pneg %p59
      %p204 = pneg %p56
      %p205 = pneg %p80
      %p206 = pneg %p77
      %p207 = pneg %p101
      %p208 = pneg %p98
      %p209 = pneg %p127
      %p210 = pneg %p124
      %p211 = scmp.lt.s32.totalorder %s17, 1
      %s212 = scalar_select %p211, %s17, 1
      %s213 = smul.addr %s212, 8
      %s214 = smul.addr %s213, 4
      %s215 = scalar_lea.vmem %s4, %s214
      %p216 = pneg %p153
      %p217 = pneg %p150
      %p218 = scmp.lt.s32.totalorder %s17, 1
      %s219 = scalar_select %p218, %s17, 1
      %s220 = smul.addr %s219, 8
      %s221 = smul.addr %s220, 8
      %s222 = scalar_lea.vmem %s5, %s221
      %p223 = scmp.lt.s32.totalorder %s17, 1
      %s224 = scalar_select %p223, %s17, 1
      %s225 = smul.addr %s224, 8
      %s226 = smul.addr %s225, 4
      %s227 = scalar_lea.vmem %s0, %s226
      %p228 = scmp.lt.s32.totalorder %s17, 1
      %s229 = scalar_select %p228, %s17, 1
      %s230 = smul.addr %s229, 8
      %s231 = smul.addr %s230, 4
      %s232 = scalar_lea.vmem %s4, %s231
      %p233 = scmp.lt.s32.totalorder %s17, 1
      %s234 = scalar_select %p233, %s17, 1
      %s235 = smul.addr %s234, 8
      %s236 = smul.addr %s235, 8
      %s237 = scalar_lea.vmem %s5, %s236
      %v239 = vld [vmem:[%s227] sm:$0xff]
      %v240 = vld [vmem:[%s227 + $0x8] sm:$0xff]
      %v241 = vld [vmem:[%s227 + $0x10] sm:$0xff]
      %v242 = vld [vmem:[%s227 + $0x18] sm:$0xff]
      %v243 = vunpack.c.l.bf16 %v239
      %v244 = vunpack.c.h.bf16 %v239
      %v245 = vunpack.c.l.bf16 %v240
      %v246 = vunpack.c.h.bf16 %v240
      %v247 = vunpack.c.l.bf16 %v241
      %v248 = vunpack.c.h.bf16 %v241
      %v249 = vunpack.c.l.bf16 %v242
      %v250 = vunpack.c.h.bf16 %v242
      %v251 = vld [vmem:[%s1] sm:$0xff]
      %v252 = vld [vmem:[%s1 + $0x8] sm:$0xff]
      %v253 = vld [vmem:[%s1 + $0x10] sm:$0xff]
      %v254 = vld [vmem:[%s1 + $0x18] sm:$0xff]
      %256 = vset.pattern.permute.xlu0 0
      %257 = vperm.xlu0 %256, %v251
      %v258 = vpop.permute.xlu0 %257
      %261 = vset.pattern.permute.xlu0 0
      %262 = vperm.xlu0 %261, %v252
      %v263 = vpop.permute.xlu0 %262
      %266 = vset.pattern.permute.xlu0 0
      %267 = vperm.xlu0 %266, %v253
      %v268 = vpop.permute.xlu0 %267
      %271 = vset.pattern.permute.xlu0 0
      %272 = vperm.xlu0 %271, %v254
      %v273 = vpop.permute.xlu0 %272
      %v275 = vmul.f32 %v243, %v258
      %v276 = vmul.f32 %v244, %v258
      %v277 = vmul.f32 %v245, %v263
      %v278 = vmul.f32 %v246, %v263
      %v279 = vmul.f32 %v247, %v268
      %v280 = vmul.f32 %v248, %v268
      %v281 = vmul.f32 %v249, %v273
      %v282 = vmul.f32 %v250, %v273
      %v283 = vld [vmem:[%s2] sm:$0xff]
      %v284 = vld [vmem:[%s2 + $0x8] sm:$0xff]
      %v285 = vld [vmem:[%s2 + $0x10] sm:$0xff]
      %v286 = vld [vmem:[%s2 + $0x18] sm:$0xff]
      %288 = vset.pattern.permute.xlu0 0
      %289 = vperm.xlu0 %288, %v283
      %v290 = vpop.permute.xlu0 %289
      %293 = vset.pattern.permute.xlu0 0
      %294 = vperm.xlu0 %293, %v284
      %v295 = vpop.permute.xlu0 %294
      %298 = vset.pattern.permute.xlu0 0
      %299 = vperm.xlu0 %298, %v285
      %v300 = vpop.permute.xlu0 %299
      %303 = vset.pattern.permute.xlu0 0
      %304 = vperm.xlu0 %303, %v286
      %v305 = vpop.permute.xlu0 %304
      %v307 = vadd.f32 %v275, %v290
      %v308 = vadd.f32 %v276, %v290
      %v309 = vadd.f32 %v277, %v295
      %v310 = vadd.f32 %v278, %v295
      %v311 = vadd.f32 %v279, %v300
      %v312 = vadd.f32 %v280, %v300
      %v313 = vadd.f32 %v281, %v305
      %v314 = vadd.f32 %v282, %v305
      %v315 = vmax.f32 %v307, 0.0
      %v316 = vmax.f32 %v308, 0.0
      %v317 = vmax.f32 %v309, 0.0
      %v318 = vmax.f32 %v310, 0.0
      %v319 = vmax.f32 %v311, 0.0
      %v320 = vmax.f32 %v312, 0.0
      %v321 = vmax.f32 %v313, 0.0
      %v322 = vmax.f32 %v314, 0.0
      %v323 = vld [vmem:[%s3] sm:$0xf]
      %v324 = vld [vmem:[%s3 + $0x4] sm:$0xf]
      %v325 = vld [vmem:[%s3 + $0x8] sm:$0xf]
      %v326 = vld [vmem:[%s3 + $0xc] sm:$0xf]
      %v327 = vpack.c.bf16 %v317, %v315
      %v328 = vpack.c.bf16 %v318, %v316
      %v329 = vpack.c.bf16 %v321, %v319
      %v330 = vpack.c.bf16 %v322, %v320
      %v335 = vunpack.c.l.b16 %v323
      %v336 = vunpack.c.l.b16 %v324
      %v337 = vunpack.c.l.b16 %v325
      %v338 = vunpack.c.l.b16 %v326
      %v339 = vpack.c.b16 %v336, %v335
      %v340 = vpack.c.b16 %v338, %v337
      %vm341 = vcmask 261120
      %v343 = vsel %vm341, %v339, 0
      %v346 = vsel %vm341, %v340, 0
      %348 = vmatprep.subr.bf16.mxu0 %v328
      %349 = vmatpush1.bf16.msra.mxu0 %v327
      %350 = vmatprep.subr.bf16.mxu0 %v330
      %351 = vmatpush1.bf16.msra.mxu0 %v329
      %352 = vmatprep.subr.bf16.mxu0 0
      %353 = vmatpush1.bf16.msra.mxu0 0
      %354 = vmatprep.subr.bf16.mxu0 0
      %355 = vmatpush1.bf16.msra.mxu0 0
      %356 = vmatprep.subr.bf16.mxu0 0
      %357 = vmatpush1.bf16.msra.mxu0 0
      %358 = vmatprep.subr.bf16.mxu0 0
      %359 = vmatpush1.bf16.msra.mxu0 0
      %360 = vmatprep.subr.bf16.mxu0 0
      %361 = vmatpush1.bf16.msra.mxu0 0
      %362 = vmatprep.subr.bf16.mxu0 0
      %363 = vmatpush1.bf16.msra.mxu0 0
      %364 = vmatprep.subr.bf16.mxu0 0
      %365 = vmatpush1.bf16.msra.mxu0 0
      %366 = vmatprep.subr.bf16.mxu0 0
      %367 = vmatpush1.bf16.msra.mxu0 0
      %368 = vmatprep.subr.bf16.mxu0 0
      %369 = vmatpush1.bf16.msra.mxu0 0
      %370 = vmatprep.subr.bf16.mxu0 0
      %371 = vmatpush1.bf16.msra.mxu0 0
      %372 = vmatprep.subr.bf16.mxu0 0
      %373 = vmatpush1.bf16.msra.mxu0 0
      %374 = vmatprep.subr.bf16.mxu0 0
      %375 = vmatpush1.bf16.msra.mxu0 0
      %376 = vmatprep.subr.bf16.mxu0 0
      %377 = vmatpush1.bf16.msra.mxu0 0
      %378 = vmatprep.subr.bf16.mxu0 0
      %379 = vmatpush1.bf16.msra.mxu0 0
      %380 = vmatprep.mubr.bf16.mxu0 0
      %381 = vmatmul.mubr.bf16.gmra.mrb[0].mxu0 %v343
      %v382 = vpop.f32.mrb[0].mxu0
      %v383 = vadd.f32 0.0, %v382
      %v384 = vpop.f32.mrb[0].mxu0
      %v385 = vadd.f32 0.0, %v384
      %v386 = vpop.f32.mrb[0].mxu0
      %v387 = vadd.f32 0.0, %v386
      %v388 = vpop.f32.mrb[0].mxu0
      %v389 = vadd.f32 0.0, %v388
      %390 = vmatprep.mubr.bf16.mxu0 0
      %391 = vmatmul.mubr.bf16.gmra.mrb[0].mxu0 %v346
      %v392 = vpop.f32.mrb[0].mxu0
      %v393 = vadd.f32 0.0, %v392
      %v394 = vpop.f32.mrb[0].mxu0
      %v395 = vadd.f32 0.0, %v394
      %v396 = vpop.f32.mrb[0].mxu0
      %v397 = vadd.f32 0.0, %v396
      %v398 = vpop.f32.mrb[0].mxu0
      %v399 = vadd.f32 0.0, %v398
      %400 = vdwg.mxu0
      %v401 = vpack.c.bf16 %v387, %v383
      %v402 = vpack.c.bf16 %v389, %v385
      %v403 = vpack.c.bf16 %v397, %v393
      %v404 = vpack.c.bf16 %v399, %v395
      %v409 = vunpack.c.l.b16 %v401
      %v410 = vunpack.c.l.b16 %v402
      %v411 = vunpack.c.h.b16 %v401
      %v412 = vunpack.c.h.b16 %v402
      %v413 = vunpack.c.l.b16 %v403
      %v414 = vunpack.c.l.b16 %v404
      %v415 = vunpack.c.h.b16 %v403
      %v416 = vunpack.c.h.b16 %v404
      %v417 = vpack.c.b16 %v410, %v409
      %v418 = vpack.c.b16 %v412, %v411
      %v419 = vpack.c.b16 %v414, %v413
      %v420 = vpack.c.b16 %v416, %v415
      %425 = vst [vmem:[%s232] sm:$0xff] %v417
      %426 = vst [vmem:[%s232 + $0x8] sm:$0xff] %v418
      %427 = vst [vmem:[%s232 + $0x10] sm:$0xff] %v419
      %428 = vst [vmem:[%s232 + $0x18] sm:$0xff] %v420
      %v429 = vadd.f32 %v383, %v385
      %430 = vadd.xlane.f32.xlu0 %v429
      %v431 = vpop.xlane.xlu0 %430
      %v432 = vadd.f32 %v387, %v389
      %433 = vadd.xlane.f32.xlu0 %v432
      %v434 = vpop.xlane.xlu0 %433
      %v435 = vadd.f32 %v393, %v395
      %436 = vadd.xlane.f32.xlu0 %v435
      %v437 = vpop.xlane.xlu0 %436
      %v438 = vadd.f32 %v397, %v399
      %439 = vadd.xlane.f32.xlu0 %v438
      %v440 = vpop.xlane.xlu0 %439
      %v441 = vadd.f32 %v431, 0.0
      %v442 = vadd.f32 %v434, 0.0
      %v443 = vadd.f32 %v437, 0.0
      %v444 = vadd.f32 %v440, 0.0
      %v445 = vmul.f32 %v383, %v383
      %v446 = vmul.f32 %v385, %v385
      %v447 = vmul.f32 %v387, %v387
      %v448 = vmul.f32 %v389, %v389
      %v449 = vmul.f32 %v393, %v393
      %v450 = vmul.f32 %v395, %v395
      %v451 = vmul.f32 %v397, %v397
      %v452 = vmul.f32 %v399, %v399
      %v453 = vadd.f32 %v445, %v446
      %454 = vadd.xlane.f32.xlu0 %v453
      %v455 = vpop.xlane.xlu0 %454
      %v456 = vadd.f32 %v447, %v448
      %457 = vadd.xlane.f32.xlu0 %v456
      %v458 = vpop.xlane.xlu0 %457
      %v459 = vadd.f32 %v449, %v450
      %460 = vadd.xlane.f32.xlu0 %v459
      %v461 = vpop.xlane.xlu0 %460
      %v462 = vadd.f32 %v451, %v452
      %463 = vadd.xlane.f32.xlu0 %v462
      %v464 = vpop.xlane.xlu0 %463
      %v465 = vadd.f32 %v455, 0.0
      %v466 = vadd.f32 %v458, 0.0
      %v467 = vadd.f32 %v461, 0.0
      %v468 = vadd.f32 %v464, 0.0
      %vm469 = vcmask 7168
      %470 = vst.msk [vmem:[%s237] sm:$0xff] %vm469, %v441
      %471 = vst.msk [vmem:[%s237 + $0x8] sm:$0xff] %vm469, %v442
      %472 = vst.msk [vmem:[%s237 + $0x10] sm:$0xff] %vm469, %v443
      %473 = vst.msk [vmem:[%s237 + $0x18] sm:$0xff] %vm469, %v444
      %474 = vst.msk [vmem:[%s237 + $0x20] sm:$0xff] %vm469, %v465
      %475 = vst.msk [vmem:[%s237 + $0x28] sm:$0xff] %vm469, %v466
      %476 = vst.msk [vmem:[%s237 + $0x30] sm:$0xff] %vm469, %v467
      %477 = vst.msk [vmem:[%s237 + $0x38] sm:$0xff] %vm469, %v468
      %p478 = scmp.lt.s32.totalorder %s17, 1
      %s479 = scalar_select %p478, %s17, 1
      %s480 = smul.addr %s479, 8
      %s481 = smul.addr %s480, 4
      %s482 = scalar_lea.vmem %s4, %s481
      %p483 = scmp.lt.s32.totalorder %s17, 1
      %s484 = scalar_select %p483, %s17, 1
      %s485 = smul.addr %s484, 8
      %s486 = smul.addr %s485, 8
      %s487 = scalar_lea.vmem %s5, %s486
      // Predicated region
      $region37: #{resblock_pallas.4} parent=35 // pred_check
        %p488 = pneg %p124
      $region38: #{resblock_pallas.4} parent=35 // pred_check_branch
        %490 = sbr.rel (%p488) target = $region40
      $region39: #{resblock_pallas.4} parent=35 // pred_region
        _
      $region40: #{resblock_pallas.4} parent=35 // pred_fallthru
        _
      // Predicated region
      $region41: #{resblock_pallas.4} parent=35 // pred_check
        %p491 = pneg %p150
      $region42: #{resblock_pallas.4} parent=35 // pred_check_branch
        %493 = sbr.rel (%p491) target = $region44
      $region43: #{resblock_pallas.4} parent=35 // pred_region
        _
      $region44: #{resblock_pallas.4} parent=35 // pred_fallthru
        _
    $region36: #{resblock_pallas.4} parent=5 // pred_fallthru
      _
    %p494 = scmp.le.s32.totalorder 2, %s12
    // Predicated region
    $region45: #{resblock_pallas.4} parent=5 // pred_check
      %p495 = pneg %p494
    $region46: #{resblock_pallas.4} parent=5 // pred_check_branch
      %497 = sbr.rel (%p495) target = $region48
    $region47: #{resblock_pallas.4} parent=5 // pred_region
      %s498 = ssub.s32 %s12, 2
      // Predicated region
      $region49: #{resblock_pallas.4} parent=47 // pred_check
        %p499 = pneg %p130
      $region50: #{resblock_pallas.4} parent=47 // pred_check_branch
        %501 = sbr.rel (%p499) target = $region52
      $region51: #{resblock_pallas.4} parent=47 // pred_region
        %p502 = scmp.lt.s32.totalorder %s18, 1
        %s503 = scalar_select %p502, %s18, 1
        %s504 = smul.addr %s503, 8
        %s505 = smul.addr %s504, 4
        %s506 = scalar_lea.vmem %s4, %s505
      $region52: #{resblock_pallas.4} parent=47 // pred_fallthru
        _
      // Predicated region
      $region53: #{resblock_pallas.4} parent=47 // pred_check
        %p507 = pneg %p156
      $region54: #{resblock_pallas.4} parent=47 // pred_check_branch
        %509 = sbr.rel (%p507) target = $region56
      $region55: #{resblock_pallas.4} parent=47 // pred_region
        %p510 = scmp.lt.s32.totalorder %s18, 1
        %s511 = scalar_select %p510, %s18, 1
        %s512 = smul.addr %s511, 8
        %s513 = smul.addr %s512, 8
        %s514 = scalar_lea.vmem %s5, %s513
      $region56: #{resblock_pallas.4} parent=47 // pred_fallthru
        _
    $region48: #{resblock_pallas.4} parent=5 // pred_fallthru
      _
  $region6: #{resblock_pallas.4} parent=0 // loop_footer
    %s16 = sadd.s32 1, %s12
  $region7: #{resblock_pallas.4} parent=0 // loop_footer_branch
    %11 = sbr.rel target = $region3
  $region8: #{resblock_pallas.4} parent=0 // loop_exit
    _

// kernel: resblock_pallas.3
$region0: #{resblock_pallas.3}
  #allocation0 [shape = 'u32[]', space=smem, size = 0x4, offset = 0x4, fixed_abs, tag = 'smem constant byte address 0x4 - core index']
  #allocation1 [shape = 'u32[144,128]{1,0:T(1,128)}', space=vmem, size = 0x12000, scoped, tag = 'internal scratch']
  %s0 = inlined_call_operand.vmem [shape: f32[2,32,256], index: 0, kind: input, shape index: {}]
  %s1 = inlined_call_operand.vmem [shape: f32[9,256], index: 1, kind: input, shape index: {}]
  %s2 = inlined_call_operand.vmem [shape: bf16[9,32,32], index: 2, kind: input, shape index: {}]
  %s3 = inlined_call_operand.vmem [shape: bf16[2,32,256], index: 3, kind: output, shape index: {0}]
  %s4 = inlined_call_operand.vmem [shape: f32[2,64,1], index: 4, kind: output, shape index: {1}]
  %5 = xla_tuple %s3, %s4
  %s6 = sld [smem:[#allocation0]]
  $region53: #{resblock_pallas.3} parent=0
    _
  %s8 = ssub.s32 1, %s6
  %s9 = scalar_select 0, %s8, %s6
  loop: start=0, step=1, limit=4
  $region2: #{resblock_pallas.3} parent=0 // loop_pre_header
    _
  $region3: #{resblock_pallas.3} parent=0 // loop_header
    %s11 = sphi 0, %s15
    %p12 = scmp.ge.s32.totalorder %s11, 4
    %s21 = sphi 0, %s23
    %s24 = sphi 0, %s21
    %s25 = sphi 0, %s24
    %s41 = sphi 0, %s25
    %s45 = sphi 0, %s45
    %s47 = sphi 0, %s45
    %s48 = sphi 0, %s47
    %s62 = sphi 0, %s48
    %s66 = sphi 0, %s66
    %s68 = sphi 0, %s66
    %s69 = sphi 0, %s68
    %s83 = sphi 0, %s69
    %s89 = sphi 0, %s91
    %s92 = sphi 0, %s89
    %s93 = sphi 0, %s92
    %s109 = sphi 0, %s93
    %s115 = sphi 0, %s117
    %s118 = sphi 0, %s115
    %s119 = sphi 0, %s118
    %s135 = sphi 0, %s119
  $region4: #{resblock_pallas.3} parent=0 // loop_header_branch
    %14 = sbr.rel (%p12) target = $region8
  $region5: #{resblock_pallas.3} parent=0 // loop_body
    %s16 = ssub.s32 %s11, 1
    %s17 = ssub.s32 %s11, 2
    %s18 = sadd.s32 %s11, 1
    %s19 = ssub.s32 %s11, %s18
    %p20 = scmp.eq.s32.totalorder %s19, 0
    %s22 = sadd.s32 %s21, 1
    %s23 = scalar_select %p20, %s21, %s22
    %p26 = pneg %p20
    %p27 = scmp.eq.s32.totalorder %s11, 1
    %p28 = por %p26, %p27
    %p29 = scmp.ne.s32.totalorder %s21, %s24
    %p30 = scmp.eq.s32.totalorder %s11, 0
    %p31 = por %p29, %p30
    %p32 = scmp.ne.s32.totalorder %s21, %s24
    %p33 = scmp.eq.s32.totalorder %s16, 1
    %p34 = por %p32, %p33
    %p35 = scmp.ne.s32.totalorder %s24, %s25
    %p36 = scmp.eq.s32.totalorder %s16, 0
    %p37 = por %p35, %p36
    %p38 = scmp.ne.s32.totalorder %s24, %s25
    %p39 = scmp.eq.s32.totalorder %s17, 1
    %p40 = por %p38, %p39
    %p42 = scmp.ne.s32.totalorder %s25, %s41
    %p43 = scmp.eq.s32.totalorder %s17, 0
    %p44 = por %p42, %p43
    %s46 = sadd.s32 %s45, 1
    %p49 = scmp.eq.s32.totalorder %s11, 1
    %p50 = scmp.ne.s32.totalorder %s45, %s47
    %p51 = scmp.eq.s32.totalorder %s11, 0
    %p52 = por %p50, %p51
    %p53 = scmp.ne.s32.totalorder %s45, %s47
    %p54 = scmp.eq.s32.totalorder %s16, 1
    %p55 = por %p53, %p54
    %p56 = scmp.ne.s32.totalorder %s47, %s48
    %p57 = scmp.eq.s32.totalorder %s16, 0
    %p58 = por %p56, %p57
    %p59 = scmp.ne.s32.totalorder %s47, %s48
    %p60 = scmp.eq.s32.totalorder %s17, 1
    %p61 = por %p59, %p60
    %p63 = scmp.ne.s32.totalorder %s48, %s62
    %p64 = scmp.eq.s32.totalorder %s17, 0
    %p65 = por %p63, %p64
    %s67 = sadd.s32 %s66, 1
    %p70 = scmp.eq.s32.totalorder %s11, 1
    %p71 = scmp.ne.s32.totalorder %s66, %s68
    %p72 = scmp.eq.s32.totalorder %s11, 0
    %p73 = por %p71, %p72
    %p74 = scmp.ne.s32.totalorder %s66, %s68
    %p75 = scmp.eq.s32.totalorder %s16, 1
    %p76 = por %p74, %p75
    %p77 = scmp.ne.s32.totalorder %s68, %s69
    %p78 = scmp.eq.s32.totalorder %s16, 0
    %p79 = por %p77, %p78
    %p80 = scmp.ne.s32.totalorder %s68, %s69
    %p81 = scmp.eq.s32.totalorder %s17, 1
    %p82 = por %p80, %p81
    %p84 = scmp.ne.s32.totalorder %s69, %s83
    %p85 = scmp.eq.s32.totalorder %s17, 0
    %p86 = por %p84, %p85
    %s87 = ssub.s32 %s11, %s18
    %p88 = scmp.eq.s32.totalorder %s87, 0
    %s90 = sadd.s32 %s89, 1
    %s91 = scalar_select %p88, %s89, %s90
    %p94 = pneg %p88
    %p95 = scmp.eq.s32.totalorder %s11, 1
    %p96 = por %p94, %p95
    %p97 = scmp.ne.s32.totalorder %s89, %s92
    %p98 = scmp.eq.s32.totalorder %s11, 0
    %p99 = por %p97, %p98
    %p100 = scmp.ne.s32.totalorder %s89, %s92
    %p101 = scmp.eq.s32.totalorder %s16, 1
    %p102 = por %p100, %p101
    %p103 = scmp.ne.s32.totalorder %s92, %s93
    %p104 = scmp.eq.s32.totalorder %s16, 0
    %p105 = por %p103, %p104
    %p106 = scmp.ne.s32.totalorder %s92, %s93
    %p107 = scmp.eq.s32.totalorder %s17, 1
    %p108 = por %p106, %p107
    %p110 = scmp.ne.s32.totalorder %s93, %s109
    %p111 = scmp.eq.s32.totalorder %s17, 0
    %p112 = por %p110, %p111
    %s113 = ssub.s32 %s11, %s18
    %p114 = scmp.eq.s32.totalorder %s113, 0
    %s116 = sadd.s32 %s115, 1
    %s117 = scalar_select %p114, %s115, %s116
    %p120 = pneg %p114
    %p121 = scmp.eq.s32.totalorder %s11, 1
    %p122 = por %p120, %p121
    %p123 = scmp.ne.s32.totalorder %s115, %s118
    %p124 = scmp.eq.s32.totalorder %s11, 0
    %p125 = por %p123, %p124
    %p126 = scmp.ne.s32.totalorder %s115, %s118
    %p127 = scmp.eq.s32.totalorder %s16, 1
    %p128 = por %p126, %p127
    %p129 = scmp.ne.s32.totalorder %s118, %s119
    %p130 = scmp.eq.s32.totalorder %s16, 0
    %p131 = por %p129, %p130
    %p132 = scmp.ne.s32.totalorder %s118, %s119
    %p133 = scmp.eq.s32.totalorder %s17, 1
    %p134 = por %p132, %p133
    %p136 = scmp.ne.s32.totalorder %s119, %s135
    %p137 = scmp.eq.s32.totalorder %s17, 0
    %p138 = por %p136, %p137
    %p139 = scmp.le.s32.totalorder 1, %s11
    %p140 = scmp.lt.s32.totalorder %s11, 3
    %p141 = pnand %p139, %p140
    %p142 = pneg %p141
    // Predicated region
    $region9: #{resblock_pallas.3} parent=5 // pred_check
      _
    $region10: #{resblock_pallas.3} parent=5 // pred_check_branch
      %144 = sbr.rel (%p141) target = $region12
    $region11: #{resblock_pallas.3} parent=5 // pred_region
      %s145 = ssub.s32 %s11, 1
      // Predicated region
      $region13: #{resblock_pallas.3} parent=11 // pred_check
        %p146 = pneg %p58
      $region14: #{resblock_pallas.3} parent=11 // pred_check_branch
        %148 = sbr.rel (%p146) target = $region16
      $region15: #{resblock_pallas.3} parent=11 // pred_region
        _
      $region16: #{resblock_pallas.3} parent=11 // pred_fallthru
        _
      // Predicated region
      $region17: #{resblock_pallas.3} parent=11 // pred_check
        %p149 = pneg %p79
      $region18: #{resblock_pallas.3} parent=11 // pred_check_branch
        %151 = sbr.rel (%p149) target = $region20
      $region19: #{resblock_pallas.3} parent=11 // pred_region
        _
      $region20: #{resblock_pallas.3} parent=11 // pred_fallthru
        _
    $region12: #{resblock_pallas.3} parent=5 // pred_fallthru
      _
    %p152 = scmp.lt.s32.totalorder %s11, 2
    // Predicated region
    $region21: #{resblock_pallas.3} parent=5 // pred_check
      %p153 = pneg %p152
    $region22: #{resblock_pallas.3} parent=5 // pred_check_branch
      %155 = sbr.rel (%p153) target = $region24
    $region23: #{resblock_pallas.3} parent=5 // pred_region
      // Predicated region
      $region25: #{resblock_pallas.3} parent=23 // pred_check
        %p156 = pneg %p31
      $region26: #{resblock_pallas.3} parent=23 // pred_check_branch
        %158 = sbr.rel (%p156) target = $region28
      $region27: #{resblock_pallas.3} parent=23 // pred_region
        %p159 = scmp.lt.s32.totalorder %s11, 1
        %s160 = scalar_select %p159, %s11, 1
        %s161 = smul.addr %s160, 8
        %s162 = smul.addr %s161, 8
        %s163 = scalar_lea.vmem %s0, %s162
      $region28: #{resblock_pallas.3} parent=23 // pred_fallthru
        _
    $region24: #{resblock_pallas.3} parent=5 // pred_fallthru
      _
    %p164 = scmp.le.s32.totalorder 1, %s11
    %p165 = scmp.lt.s32.totalorder %s11, 3
    %p166 = pnand %p164, %p165
    %p167 = pneg %p166
    // Predicated region
    $region29: #{resblock_pallas.3} parent=5 // pred_check
      _
    $region30: #{resblock_pallas.3} parent=5 // pred_check_branch
      %169 = sbr.rel (%p166) target = $region32
    $region31: #{resblock_pallas.3} parent=5 // pred_region
      %s170 = ssub.s32 %s11, 1
      %p171 = scmp.lt.s32.totalorder %s16, 1
      %s172 = scalar_select %p171, %s16, 1
      %s173 = smul.addr %s172, 8
      %s174 = smul.addr %s173, 8
      %s175 = scalar_lea.vmem %s0, %s174
      %p176 = pneg %p37
      %p177 = pneg %p34
      %p178 = pneg %p58
      %p179 = pneg %p55
      %p180 = pneg %p79
      %p181 = pneg %p76
      %p182 = pneg %p105
      %p183 = pneg %p102
      %p184 = scmp.lt.s32.totalorder %s16, 1
      %s185 = scalar_select %p184, %s16, 1
      %s186 = smul.addr %s185, 8
      %s187 = smul.addr %s186, 4
      %s188 = scalar_lea.vmem %s3, %s187
      %p189 = pneg %p131
      %p190 = pneg %p128
      %p191 = scmp.lt.s32.totalorder %s16, 1
      %s192 = scalar_select %p191, %s16, 1
      %s193 = smul.addr %s192, 8
      %s194 = smul.addr %s193, 8
      %s195 = scalar_lea.vmem %s4, %s194
      %p196 = scmp.lt.s32.totalorder %s16, 1
      %s197 = scalar_select %p196, %s16, 1
      %s198 = smul.addr %s197, 8
      %s199 = smul.addr %s198, 8
      %s200 = scalar_lea.vmem %s0, %s199
      %p201 = scmp.lt.s32.totalorder %s16, 1
      %s202 = scalar_select %p201, %s16, 1
      %s203 = smul.addr %s202, 8
      %s204 = smul.addr %s203, 4
      %s205 = scalar_lea.vmem %s3, %s204
      %p206 = scmp.lt.s32.totalorder %s16, 1
      %s207 = scalar_select %p206, %s16, 1
      %s208 = smul.addr %s207, 8
      %s209 = smul.addr %s208, 8
      %s210 = scalar_lea.vmem %s4, %s209
      %v212 = vld [vmem:[%s200] sm:$0xff]
      %v213 = vld [vmem:[%s200 + $0x8] sm:$0xff]
      %v214 = vld [vmem:[%s200 + $0x10] sm:$0xff]
      %v215 = vld [vmem:[%s200 + $0x18] sm:$0xff]
      %v216 = vld [vmem:[%s200 + $0x20] sm:$0xff]
      %v217 = vld [vmem:[%s200 + $0x28] sm:$0xff]
      %v218 = vld [vmem:[%s200 + $0x30] sm:$0xff]
      %v219 = vld [vmem:[%s200 + $0x38] sm:$0xff]
      %v220 = vmax.f32 %v212, 0.0
      %v221 = vmax.f32 %v213, 0.0
      %v222 = vmax.f32 %v214, 0.0
      %v223 = vmax.f32 %v215, 0.0
      %v224 = vmax.f32 %v216, 0.0
      %v225 = vmax.f32 %v217, 0.0
      %v226 = vmax.f32 %v218, 0.0
      %v227 = vmax.f32 %v219, 0.0
      %228 = vrot.lane.b32.xlu0 %v220, 17
      %v229 = vpop.permute.xlu0 %228
      %230 = vrot.lane.b32.xlu0 %v222, 17
      %v231 = vpop.permute.xlu0 %230
      %232 = vrot.lane.b32.xlu0 %v224, 17
      %v233 = vpop.permute.xlu0 %232
      %234 = vrot.lane.b32.xlu0 %v226, 17
      %v235 = vpop.permute.xlu0 %234
      %236 = vrot.lane.b32.xlu0 %v221, 17
      %v237 = vpop.permute.xlu0 %236
      %238 = vrot.lane.b32.xlu0 %v223, 17
      %v239 = vpop.permute.xlu0 %238
      %240 = vrot.lane.b32.xlu0 %v225, 17
      %v241 = vpop.permute.xlu0 %240
      %242 = vrot.lane.b32.xlu0 %v227, 17
      %v243 = vpop.permute.xlu0 %242
      %v244 = vlaneseq
      %v245 = vand.u32 %v244, 127
      %vm246 = vcmp.lt.s32.totalorder %v245, 17
      %v247 = vsel %vm246, %v229, %v237
      %v248 = vsel %vm246, %v231, %v239
      %v249 = vsel %vm246, %v233, %v241
      %v250 = vsel %vm246, %v235, %v243
      %v251 = vsel %vm246, %v237, %v229
      %v252 = vsel %vm246, %v239, %v231
      %v253 = vsel %vm246, %v241, %v233
      %v254 = vsel %vm246, %v243, %v235
      %v255 = vld [vmem:[%s1] ss:$8 sm:$0x3]
      %v257 = vlaneseq
      %v258 = vshrl.u32 %v257, 7
      %v259 = vsub.s32 0, %v258
      %v260 = vrot.slane %v255, %v259
      %v261 = vlaneseq
      %v262 = vshrl.u32 %v261, 7
      %v263 = vsub.s32 1, %v262
      %v264 = vrot.slane %v255, %v263
      %v267 = vmul.f32 %v251, %v260
      %v268 = vmul.f32 %v247, %v264
      %v269 = vmul.f32 %v252, %v260
      %v270 = vmul.f32 %v248, %v264
      %v271 = vmul.f32 %v253, %v260
      %v272 = vmul.f32 %v249, %v264
      %v273 = vmul.f32 %v254, %v260
      %v274 = vmul.f32 %v250, %v264
      %v275 = vld [vmem:[%s2] sm:$0xf]
      %v276 = vld [vmem:[%s2 + $0x4] sm:$0xf]
      %v277 = vld [vmem:[%s2 + $0x8] sm:$0xf]
      %v278 = vld [vmem:[%s2 + $0xc] sm:$0xf]
      %v279 = vpack.c.bf16 %v269, %v267
      %v280 = vpack.c.bf16 %v270, %v268
      %v281 = vpack.c.bf16 %v273, %v271
      %v282 = vpack.c.bf16 %v274, %v272
      %283 = vrot.lane.b32.xlu0 %v220, 16
      %v284 = vpop.permute.xlu0 %283
      %285 = vrot.lane.b32.xlu0 %v222, 16
      %v286 = vpop.permute.xlu0 %285
      %287 = vrot.lane.b32.xlu0 %v224, 16
      %v288 = vpop.permute.xlu0 %287
      %289 = vrot.lane.b32.xlu0 %v226, 16
      %v290 = vpop.permute.xlu0 %289
      %291 = vrot.lane.b32.xlu0 %v221, 16
      %v292 = vpop.permute.xlu0 %291
      %293 = vrot.lane.b32.xlu0 %v223, 16
      %v294 = vpop.permute.xlu0 %293
      %295 = vrot.lane.b32.xlu0 %v225, 16
      %v296 = vpop.permute.xlu0 %295
      %297 = vrot.lane.b32.xlu0 %v227, 16
      %v298 = vpop.permute.xlu0 %297
      %vm299 = vcmp.lt.s32.totalorder %v245, 16
      %v300 = vsel %vm299, %v284, %v292
      %v301 = vsel %vm299, %v286, %v294
      %v302 = vsel %vm299, %v288, %v296
      %v303 = vsel %vm299, %v290, %v298
      %v304 = vsel %vm299, %v292, %v284
      %v305 = vsel %vm299, %v294, %v286
      %v306 = vsel %vm299, %v296, %v288
      %v307 = vsel %vm299, %v298, %v290
      %s308 = scalar_lea.vmem %s1, 1
      %v309 = vld [vmem:[%s308] ss:$8 sm:$0x3]
      %v311 = vlaneseq
      %v312 = vshrl.u32 %v311, 7
      %v313 = vsub.s32 0, %v312
      %v314 = vrot.slane %v309, %v313
      %v315 = vlaneseq
      %v316 = vshrl.u32 %v315, 7
      %v317 = vsub.s32 1, %v316
      %v318 = vrot.slane %v309, %v317
      %v321 = vmul.f32 %v304, %v314
      %v322 = vmul.f32 %v300, %v318
      %v323 = vmul.f32 %v305, %v314
      %v324 = vmul.f32 %v301, %v318
      %v325 = vmul.f32 %v306, %v314
      %v326 = vmul.f32 %v302, %v318
      %v327 = vmul.f32 %v307, %v314
      %v328 = vmul.f32 %v303, %v318
      %s329 = scalar_lea.vmem %s2, 16
      %v330 = vld [vmem:[%s329] sm:$0xf]
      %v331 = vld [vmem:[%s329 + $0x4] sm:$0xf]
      %v332 = vld [vmem:[%s329 + $0x8] sm:$0xf]
      %v333 = vld [vmem:[%s329 + $0xc] sm:$0xf]
      %v334 = vpack.c.bf16 %v323, %v321
      %v335 = vpack.c.bf16 %v324, %v322
      %v336 = vpack.c.bf16 %v327, %v325
      %v337 = vpack.c.bf16 %v328, %v326
      %v342 = vunpack.c.l.b16 %v330
      %v343 = vunpack.c.l.b16 %v331
      %v344 = vunpack.c.l.b16 %v332
      %v345 = vunpack.c.l.b16 %v333
      %v346 = vpack.c.b16 %v343, %v342
      %v347 = vpack.c.b16 %v345, %v344
      %vm348 = vcmask 261120
      %v350 = vsel %vm348, %v346, 0
      %v353 = vsel %vm348, %v347, 0
      %355 = vmatprep.subr.bf16.mxu0 %v335
      %356 = vmatpush1.bf16.msra.mxu0 %v334
      %357 = vmatprep.subr.bf16.mxu0 %v337
      %358 = vmatpush1.bf16.msra.mxu0 %v336
      %359 = vmatprep.subr.bf16.mxu0 0
      %360 = vmatpush1.bf16.msra.mxu0 0
      %361 = vmatprep.subr.bf16.mxu0 0
      %362 = vmatpush1.bf16.msra.mxu0 0
      %363 = vmatprep.subr.bf16.mxu0 0
      %364 = vmatpush1.bf16.msra.mxu0 0
      %365 = vmatprep.subr.bf16.mxu0 0
      %366 = vmatpush1.bf16.msra.mxu0 0
      %367 = vmatprep.subr.bf16.mxu0 0
      %368 = vmatpush1.bf16.msra.mxu0 0
      %369 = vmatprep.subr.bf16.mxu0 0
      %370 = vmatpush1.bf16.msra.mxu0 0
      %371 = vmatprep.subr.bf16.mxu0 0
      %372 = vmatpush1.bf16.msra.mxu0 0
      %373 = vmatprep.subr.bf16.mxu0 0
      %374 = vmatpush1.bf16.msra.mxu0 0
      %375 = vmatprep.subr.bf16.mxu0 0
      %376 = vmatpush1.bf16.msra.mxu0 0
      %377 = vmatprep.subr.bf16.mxu0 0
      %378 = vmatpush1.bf16.msra.mxu0 0
      %379 = vmatprep.subr.bf16.mxu0 0
      %380 = vmatpush1.bf16.msra.mxu0 0
      %381 = vmatprep.subr.bf16.mxu0 0
      %382 = vmatpush1.bf16.msra.mxu0 0
      %383 = vmatprep.subr.bf16.mxu0 0
      %384 = vmatpush1.bf16.msra.mxu0 0
      %385 = vmatprep.subr.bf16.mxu0 0
      %386 = vmatpush1.bf16.msra.mxu0 0
      %387 = vmatprep.mubr.bf16.mxu0 0
      %388 = vmatmul.mubr.bf16.gmra.mrb[0].mxu0 %v350
      %v389 = vpop.f32.mrb[0].mxu0
      %v390 = vadd.f32 0.0, %v389
      %v391 = vpop.f32.mrb[0].mxu0
      %v392 = vadd.f32 0.0, %v391
      %v393 = vpop.f32.mrb[0].mxu0
      %v394 = vadd.f32 0.0, %v393
      %v395 = vpop.f32.mrb[0].mxu0
      %v396 = vadd.f32 0.0, %v395
      %397 = vmatprep.mubr.bf16.mxu0 0
      %398 = vmatmul.mubr.bf16.gmra.mrb[0].mxu0 %v353
      %v399 = vpop.f32.mrb[0].mxu0
      %v400 = vadd.f32 0.0, %v399
      %v401 = vpop.f32.mrb[0].mxu0
      %v402 = vadd.f32 0.0, %v401
      %v403 = vpop.f32.mrb[0].mxu0
      %v404 = vadd.f32 0.0, %v403
      %v405 = vpop.f32.mrb[0].mxu0
      %v406 = vadd.f32 0.0, %v405
      %407 = vdwg.mxu0
      %v412 = vunpack.c.l.b16 %v275
      %v413 = vunpack.c.l.b16 %v276
      %v414 = vunpack.c.l.b16 %v277
      %v415 = vunpack.c.l.b16 %v278
      %v416 = vpack.c.b16 %v413, %v412
      %v417 = vpack.c.b16 %v415, %v414
      %v419 = vsel %vm348, %v416, 0
      %v422 = vsel %vm348, %v417, 0
      %424 = vmatprep.subr.bf16.mxu0 %v280
      %425 = vmatpush1.bf16.msra.mxu0 %v279
      %426 = vmatprep.subr.bf16.mxu0 %v282
      %427 = vmatpush1.bf16.msra.mxu0 %v281
      %428 = vmatprep.subr.bf16.mxu0 0
      %429 = vmatpush1.bf16.msra.mxu0 0
      %430 = vmatprep.subr.bf16.mxu0 0
      %431 = vmatpush1.bf16.msra.mxu0 0
      %432 = vmatprep.subr.bf16.mxu0 0
      %433 = vmatpush1.bf16.msra.mxu0 0
      %434 = vmatprep.subr.bf16.mxu0 0
      %435 = vmatpush1.bf16.msra.mxu0 0
      %436 = vmatprep.subr.bf16.mxu0 0
      %437 = vmatpush1.bf16.msra.mxu0 0
      %438 = vmatprep.subr.bf16.mxu0 0
      %439 = vmatpush1.bf16.msra.mxu0 0
      %440 = vmatprep.subr.bf16.mxu0 0
      %441 = vmatpush1.bf16.msra.mxu0 0
      %442 = vmatprep.subr.bf16.mxu0 0
      %443 = vmatpush1.bf16.msra.mxu0 0
      %444 = vmatprep.subr.bf16.mxu0 0
      %445 = vmatpush1.bf16.msra.mxu0 0
      %446 = vmatprep.subr.bf16.mxu0 0
      %447 = vmatpush1.bf16.msra.mxu0 0
      %448 = vmatprep.subr.bf16.mxu0 0
      %449 = vmatpush1.bf16.msra.mxu0 0
      %450 = vmatprep.subr.bf16.mxu0 0
      %451 = vmatpush1.bf16.msra.mxu0 0
      %452 = vmatprep.subr.bf16.mxu0 0
      %453 = vmatpush1.bf16.msra.mxu0 0
      %454 = vmatprep.subr.bf16.mxu0 0
      %455 = vmatpush1.bf16.msra.mxu0 0
      %456 = vmatprep.mubr.bf16.mxu0 0
      %457 = vmatmul.mubr.bf16.gmra.mrb[0].mxu0 %v419
      %v458 = vpop.f32.mrb[0].mxu0
      %v459 = vadd.f32 %v390, %v458
      %v460 = vpop.f32.mrb[0].mxu0
      %v461 = vadd.f32 %v392, %v460
      %v462 = vpop.f32.mrb[0].mxu0
      %v463 = vadd.f32 %v394, %v462
      %v464 = vpop.f32.mrb[0].mxu0
      %v465 = vadd.f32 %v396, %v464
      %466 = vmatprep.mubr.bf16.mxu0 0
      %467 = vmatmul.mubr.bf16.gmra.mrb[0].mxu0 %v422
      %v468 = vpop.f32.mrb[0].mxu0
      %v469 = vadd.f32 %v400, %v468
      %v470 = vpop.f32.mrb[0].mxu0
      %v471 = vadd.f32 %v402, %v470
      %v472 = vpop.f32.mrb[0].mxu0
      %v473 = vadd.f32 %v404, %v472
      %v474 = vpop.f32.mrb[0].mxu0
      %v475 = vadd.f32 %v406, %v474
      %476 = vdwg.mxu0
      %477 = vrot.lane.b32.xlu0 %v220, 15
      %v478 = vpop.permute.xlu0 %477
      %479 = vrot.lane.b32.xlu0 %v222, 15
      %v480 = vpop.permute.xlu0 %479
      %481 = vrot.lane.b32.xlu0 %v224, 15
      %v482 = vpop.permute.xlu0 %481
      %483 = vrot.lane.b32.xlu0 %v226, 15
      %v484 = vpop.permute.xlu0 %483
      %485 = vrot.lane.b32.xlu0 %v221, 15
      %v486 = vpop.permute.xlu0 %485
      %487 = vrot.lane.b32.xlu0 %v223, 15
      %v488 = vpop.permute.xlu0 %487
      %489 = vrot.lane.b32.xlu0 %v225, 15
      %v490 = vpop.permute.xlu0 %489
      %491 = vrot.lane.b32.xlu0 %v227, 15
      %v492 = vpop.permute.xlu0 %491
      %vm493 = vcmp.lt.s32.totalorder %v245, 15
      %v494 = vsel %vm493, %v478, %v486
      %v495 = vsel %vm493, %v480, %v488
      %v496 = vsel %vm493, %v482, %v490
      %v497 = vsel %vm493, %v484, %v492
      %v498 = vsel %vm493, %v486, %v478
      %v499 = vsel %vm493, %v488, %v480
      %v500 = vsel %vm493, %v490, %v482
      %v501 = vsel %vm493, %v492, %v484
      %s502 = scalar_lea.vmem %s1, 2
      %v503 = vld [vmem:[%s502] ss:$8 sm:$0x3]
      %v505 = vlaneseq
      %v506 = vshrl.u32 %v505, 7
      %v507 = vsub.s32 0, %v506
      %v508 = vrot.slane %v503, %v507
      %v509 = vlaneseq
      %v510 = vshrl.u32 %v509, 7
      %v511 = vsub.s32 1, %v510
      %v512 = vrot.slane %v503, %v511
      %v515 = vmul.f32 %v498, %v508
      %v516 = vmul.f32 %v494, %v512
      %v517 = vmul.f32 %v499, %v508
      %v518 = vmul.f32 %v495, %v512
      %v519 = vmul.f32 %v500, %v508
      %v520 = vmul.f32 %v496, %v512
      %v521 = vmul.f32 %v501, %v508
      %v522 = vmul.f32 %v497, %v512
      %s523 = scalar_lea.vmem %s2, 32
      %v524 = vld [vmem:[%s523] sm:$0xf]
      %v525 = vld [vmem:[%s523 + $0x4] sm:$0xf]
      %v526 = vld [vmem:[%s523 + $0x8] sm:$0xf]
      %v527 = vld [vmem:[%s523 + $0xc] sm:$0xf]
      %v528 = vpack.c.bf16 %v517, %v515
      %v529 = vpack.c.bf16 %v518, %v516
      %v530 = vpack.c.bf16 %v521, %v519
      %v531 = vpack.c.bf16 %v522, %v520
      %v536 = vunpack.c.l.b16 %v524
      %v537 = vunpack.c.l.b16 %v525
      %v538 = vunpack.c.l.b16 %v526
      %v539 = vunpack.c.l.b16 %v527
      %v540 = vpack.c.b16 %v537, %v536
      %v541 = vpack.c.b16 %v539, %v538
      %v543 = vsel %vm348, %v540, 0
      %v546 = vsel %vm348, %v541, 0
      %548 = vmatprep.subr.bf16.mxu0 %v529
      %549 = vmatpush1.bf16.msra.mxu0 %v528
      %550 = vmatprep.subr.bf16.mxu0 %v531
      %551 = vmatpush1.bf16.msra.mxu0 %v530
      %552 = vmatprep.subr.bf16.mxu0 0
      %553 = vmatpush1.bf16.msra.mxu0 0
      %554 = vmatprep.subr.bf16.mxu0 0
      %555 = vmatpush1.bf16.msra.mxu0 0
      %556 = vmatprep.subr.bf16.mxu0 0
      %557 = vmatpush1.bf16.msra.mxu0 0
      %558 = vmatprep.subr.bf16.mxu0 0
      %559 = vmatpush1.bf16.msra.mxu0 0
      %560 = vmatprep.subr.bf16.mxu0 0
      %561 = vmatpush1.bf16.msra.mxu0 0
      %562 = vmatprep.subr.bf16.mxu0 0
      %563 = vmatpush1.bf16.msra.mxu0 0
      %564 = vmatprep.subr.bf16.mxu0 0
      %565 = vmatpush1.bf16.msra.mxu0 0
      %566 = vmatprep.subr.bf16.mxu0 0
      %567 = vmatpush1.bf16.msra.mxu0 0
      %568 = vmatprep.subr.bf16.mxu0 0
      %569 = vmatpush1.bf16.msra.mxu0 0
      %570 = vmatprep.subr.bf16.mxu0 0
      %571 = vmatpush1.bf16.msra.mxu0 0
      %572 = vmatprep.subr.bf16.mxu0 0
      %573 = vmatpush1.bf16.msra.mxu0 0
      %574 = vmatprep.subr.bf16.mxu0 0
      %575 = vmatpush1.bf16.msra.mxu0 0
      %576 = vmatprep.subr.bf16.mxu0 0
      %577 = vmatpush1.bf16.msra.mxu0 0
      %578 = vmatprep.subr.bf16.mxu0 0
      %579 = vmatpush1.bf16.msra.mxu0 0
      %580 = vmatprep.mubr.bf16.mxu0 0
      %581 = vmatmul.mubr.bf16.gmra.mrb[0].mxu0 %v543
      %v582 = vpop.f32.mrb[0].mxu0
      %v583 = vadd.f32 0.0, %v582
      %v584 = vpop.f32.mrb[0].mxu0
      %v585 = vadd.f32 0.0, %v584
      %v586 = vpop.f32.mrb[0].mxu0
      %v587 = vadd.f32 0.0, %v586
      %v588 = vpop.f32.mrb[0].mxu0
      %v589 = vadd.f32 0.0, %v588
      %590 = vmatprep.mubr.bf16.mxu0 0
      %591 = vmatmul.mubr.bf16.gmra.mrb[0].mxu0 %v546
      %v592 = vpop.f32.mrb[0].mxu0
      %v593 = vadd.f32 0.0, %v592
      %v594 = vpop.f32.mrb[0].mxu0
      %v595 = vadd.f32 0.0, %v594
      %v596 = vpop.f32.mrb[0].mxu0
      %v597 = vadd.f32 0.0, %v596
      %v598 = vpop.f32.mrb[0].mxu0
      %v599 = vadd.f32 0.0, %v598
      %600 = vdwg.mxu0
      %v601 = vadd.f32 %v459, %v583
      %v602 = vadd.f32 %v461, %v585
      %v603 = vadd.f32 %v463, %v587
      %v604 = vadd.f32 %v465, %v589
      %v605 = vadd.f32 %v469, %v593
      %v606 = vadd.f32 %v471, %v595
      %v607 = vadd.f32 %v473, %v597
      %v608 = vadd.f32 %v475, %v599
      %609 = vrot.lane.b32.xlu0 %v220, 1
      %v610 = vpop.permute.xlu0 %609
      %611 = vrot.lane.b32.xlu0 %v222, 1
      %v612 = vpop.permute.xlu0 %611
      %613 = vrot.lane.b32.xlu0 %v224, 1
      %v614 = vpop.permute.xlu0 %613
      %615 = vrot.lane.b32.xlu0 %v226, 1
      %v616 = vpop.permute.xlu0 %615
      %617 = vrot.lane.b32.xlu0 %v221, 1
      %v618 = vpop.permute.xlu0 %617
      %619 = vrot.lane.b32.xlu0 %v223, 1
      %v620 = vpop.permute.xlu0 %619
      %621 = vrot.lane.b32.xlu0 %v225, 1
      %v622 = vpop.permute.xlu0 %621
      %623 = vrot.lane.b32.xlu0 %v227, 1
      %v624 = vpop.permute.xlu0 %623
      %vm625 = vcmp.lt.s32.totalorder %v245, 1
      %v626 = vsel %vm625, %v610, %v618
      %v627 = vsel %vm625, %v612, %v620
      %v628 = vsel %vm625, %v614, %v622
      %v629 = vsel %vm625, %v616, %v624
      %v630 = vsel %vm625, %v618, %v610
      %v631 = vsel %vm625, %v620, %v612
      %v632 = vsel %vm625, %v622, %v614
      %v633 = vsel %vm625, %v624, %v616
      %s634 = scalar_lea.vmem %s1, 3
      %v635 = vld [vmem:[%s634] ss:$8 sm:$0x3]
      %v637 = vlaneseq
      %v638 = vshrl.u32 %v637, 7
      %v639 = vsub.s32 0, %v638
      %v640 = vrot.slane %v635, %v639
      %v641 = vlaneseq
      %v642 = vshrl.u32 %v641, 7
      %v643 = vsub.s32 1, %v642
      %v644 = vrot.slane %v635, %v643
      %v647 = vmul.f32 %v630, %v640
      %v648 = vmul.f32 %v626, %v644
      %v649 = vmul.f32 %v631, %v640
      %v650 = vmul.f32 %v627, %v644
      %v651 = vmul.f32 %v632, %v640
      %v652 = vmul.f32 %v628, %v644
      %v653 = vmul.f32 %v633, %v640
      %v654 = vmul.f32 %v629, %v644
      %s655 = scalar_lea.vmem %s2, 48
      %v656 = vld [vmem:[%s655] sm:$0xf]
      %v657 = vld [vmem:[%s655 + $0x4] sm:$0xf]
      %v658 = vld [vmem:[%s655 + $0x8] sm:$0xf]
      %v659 = vld [vmem:[%s655 + $0xc] sm:$0xf]
      %v660 = vpack.c.bf16 %v649, %v647
      %v661 = vpack.c.bf16 %v650, %v648
      %v662 = vpack.c.bf16 %v653, %v651
      %v663 = vpack.c.bf16 %v654, %v652
      %v668 = vunpack.c.l.b16 %v656
      %v669 = vunpack.c.l.b16 %v657
      %v670 = vunpack.c.l.b16 %v658
      %v671 = vunpack.c.l.b16 %v659
      %v672 = vpack.c.b16 %v669, %v668
      %v673 = vpack.c.b16 %v671, %v670
      %v675 = vsel %vm348, %v672, 0
      %v678 = vsel %vm348, %v673, 0
      %680 = vmatprep.subr.bf16.mxu0 %v661
      %681 = vmatpush1.bf16.msra.mxu0 %v660
      %682 = vmatprep.subr.bf16.mxu0 %v663
      %683 = vmatpush1.bf16.msra.mxu0 %v662
      %684 = vmatprep.subr.bf16.mxu0 0
      %685 = vmatpush1.bf16.msra.mxu0 0
      %686 = vmatprep.subr.bf16.mxu0 0
      %687 = vmatpush1.bf16.msra.mxu0 0
      %688 = vmatprep.subr.bf16.mxu0 0
      %689 = vmatpush1.bf16.msra.mxu0 0
      %690 = vmatprep.subr.bf16.mxu0 0
      %691 = vmatpush1.bf16.msra.mxu0 0
      %692 = vmatprep.subr.bf16.mxu0 0
      %693 = vmatpush1.bf16.msra.mxu0 0
      %694 = vmatprep.subr.bf16.mxu0 0
      %695 = vmatpush1.bf16.msra.mxu0 0
      %696 = vmatprep.subr.bf16.mxu0 0
      %697 = vmatpush1.bf16.msra.mxu0 0
      %698 = vmatprep.subr.bf16.mxu0 0
      %699 = vmatpush1.bf16.msra.mxu0 0
      %700 = vmatprep.subr.bf16.mxu0 0
      %701 = vmatpush1.bf16.msra.mxu0 0
      %702 = vmatprep.subr.bf16.mxu0 0
      %703 = vmatpush1.bf16.msra.mxu0 0
      %704 = vmatprep.subr.bf16.mxu0 0
      %705 = vmatpush1.bf16.msra.mxu0 0
      %706 = vmatprep.subr.bf16.mxu0 0
      %707 = vmatpush1.bf16.msra.mxu0 0
      %708 = vmatprep.subr.bf16.mxu0 0
      %709 = vmatpush1.bf16.msra.mxu0 0
      %710 = vmatprep.subr.bf16.mxu0 0
      %711 = vmatpush1.bf16.msra.mxu0 0
      %712 = vmatprep.mubr.bf16.mxu0 0
      %713 = vmatmul.mubr.bf16.gmra.mrb[0].mxu0 %v675
      %v714 = vpop.f32.mrb[0].mxu0
      %v715 = vadd.f32 0.0, %v714
      %v716 = vpop.f32.mrb[0].mxu0
      %v717 = vadd.f32 0.0, %v716
      %v718 = vpop.f32.mrb[0].mxu0
      %v719 = vadd.f32 0.0, %v718
      %v720 = vpop.f32.mrb[0].mxu0
      %v721 = vadd.f32 0.0, %v720
      %722 = vmatprep.mubr.bf16.mxu0 0
      %723 = vmatmul.mubr.bf16.gmra.mrb[0].mxu0 %v678
      %v724 = vpop.f32.mrb[0].mxu0
      %v725 = vadd.f32 0.0, %v724
      %v726 = vpop.f32.mrb[0].mxu0
      %v727 = vadd.f32 0.0, %v726
      %v728 = vpop.f32.mrb[0].mxu0
      %v729 = vadd.f32 0.0, %v728
      %v730 = vpop.f32.mrb[0].mxu0
      %v731 = vadd.f32 0.0, %v730
      %732 = vdwg.mxu0
      %v733 = vadd.f32 %v601, %v715
      %v734 = vadd.f32 %v602, %v717
      %v735 = vadd.f32 %v603, %v719
      %v736 = vadd.f32 %v604, %v721
      %v737 = vadd.f32 %v605, %v725
      %v738 = vadd.f32 %v606, %v727
      %v739 = vadd.f32 %v607, %v729
      %v740 = vadd.f32 %v608, %v731
      %s741 = scalar_lea.vmem %s2, 64
      %v742 = vld [vmem:[%s741] sm:$0xf]
      %v743 = vld [vmem:[%s741 + $0x4] sm:$0xf]
      %v744 = vld [vmem:[%s741 + $0x8] sm:$0xf]
      %v745 = vld [vmem:[%s741 + $0xc] sm:$0xf]
      %v746 = vpack.c.bf16 %v222, %v220
      %v747 = vpack.c.bf16 %v223, %v221
      %v748 = vpack.c.bf16 %v226, %v224
      %v749 = vpack.c.bf16 %v227, %v225
      %v754 = vunpack.c.l.b16 %v742
      %v755 = vunpack.c.l.b16 %v743
      %v756 = vunpack.c.l.b16 %v744
      %v757 = vunpack.c.l.b16 %v745
      %v758 = vpack.c.b16 %v755, %v754
      %v759 = vpack.c.b16 %v757, %v756
      %v761 = vsel %vm348, %v758, 0
      %v764 = vsel %vm348, %v759, 0
      %766 = vmatprep.subr.bf16.mxu0 %v747
      %767 = vmatpush1.bf16.msra.mxu0 %v746
      %768 = vmatprep.subr.bf16.mxu0 %v749
      %769 = vmatpush1.bf16.msra.mxu0 %v748
      %770 = vmatprep.subr.bf16.mxu0 0
      %771 = vmatpush1.bf16.msra.mxu0 0
      %772 = vmatprep.subr.bf16.mxu0 0
      %773 = vmatpush1.bf16.msra.mxu0 0
      %774 = vmatprep.subr.bf16.mxu0 0
      %775 = vmatpush1.bf16.msra.mxu0 0
      %776 = vmatprep.subr.bf16.mxu0 0
      %777 = vmatpush1.bf16.msra.mxu0 0
      %778 = vmatprep.subr.bf16.mxu0 0
      %779 = vmatpush1.bf16.msra.mxu0 0
      %780 = vmatprep.subr.bf16.mxu0 0
      %781 = vmatpush1.bf16.msra.mxu0 0
      %782 = vmatprep.subr.bf16.mxu0 0
      %783 = vmatpush1.bf16.msra.mxu0 0
      %784 = vmatprep.subr.bf16.mxu0 0
      %785 = vmatpush1.bf16.msra.mxu0 0
      %786 = vmatprep.subr.bf16.mxu0 0
      %787 = vmatpush1.bf16.msra.mxu0 0
      %788 = vmatprep.subr.bf16.mxu0 0
      %789 = vmatpush1.bf16.msra.mxu0 0
      %790 = vmatprep.subr.bf16.mxu0 0
      %791 = vmatpush1.bf16.msra.mxu0 0
      %792 = vmatprep.subr.bf16.mxu0 0
      %793 = vmatpush1.bf16.msra.mxu0 0
      %794 = vmatprep.subr.bf16.mxu0 0
      %795 = vmatpush1.bf16.msra.mxu0 0
      %796 = vmatprep.subr.bf16.mxu0 0
      %797 = vmatpush1.bf16.msra.mxu0 0
      %798 = vmatprep.mubr.bf16.mxu0 0
      %799 = vmatmul.mubr.bf16.gmra.mrb[0].mxu0 %v761
      %v800 = vpop.f32.mrb[0].mxu0
      %v801 = vadd.f32 0.0, %v800
      %v802 = vpop.f32.mrb[0].mxu0
      %v803 = vadd.f32 0.0, %v802
      %v804 = vpop.f32.mrb[0].mxu0
      %v805 = vadd.f32 0.0, %v804
      %v806 = vpop.f32.mrb[0].mxu0
      %v807 = vadd.f32 0.0, %v806
      %808 = vmatprep.mubr.bf16.mxu0 0
      %809 = vmatmul.mubr.bf16.gmra.mrb[0].mxu0 %v764
      %v810 = vpop.f32.mrb[0].mxu0
      %v811 = vadd.f32 0.0, %v810
      %v812 = vpop.f32.mrb[0].mxu0
      %v813 = vadd.f32 0.0, %v812
      %v814 = vpop.f32.mrb[0].mxu0
      %v815 = vadd.f32 0.0, %v814
      %v816 = vpop.f32.mrb[0].mxu0
      %v817 = vadd.f32 0.0, %v816
      %818 = vdwg.mxu0
      %v819 = vadd.f32 %v733, %v801
      %v820 = vadd.f32 %v734, %v803
      %v821 = vadd.f32 %v735, %v805
      %v822 = vadd.f32 %v736, %v807
      %v823 = vadd.f32 %v737, %v811
      %v824 = vadd.f32 %v738, %v813
      %v825 = vadd.f32 %v739, %v815
      %v826 = vadd.f32 %v740, %v817
      %827 = vrot.lane.b32.xlu0 %v220, 127
      %v828 = vpop.permute.xlu0 %827
      %829 = vrot.lane.b32.xlu0 %v222, 127
      %v830 = vpop.permute.xlu0 %829
      %831 = vrot.lane.b32.xlu0 %v224, 127
      %v832 = vpop.permute.xlu0 %831
      %833 = vrot.lane.b32.xlu0 %v226, 127
      %v834 = vpop.permute.xlu0 %833
      %835 = vrot.lane.b32.xlu0 %v221, 127
      %v836 = vpop.permute.xlu0 %835
      %837 = vrot.lane.b32.xlu0 %v223, 127
      %v838 = vpop.permute.xlu0 %837
      %839 = vrot.lane.b32.xlu0 %v225, 127
      %v840 = vpop.permute.xlu0 %839
      %841 = vrot.lane.b32.xlu0 %v227, 127
      %v842 = vpop.permute.xlu0 %841
      %vm843 = vcmp.lt.s32.totalorder %v245, 127
      %v844 = vsel %vm843, %v828, %v836
      %v845 = vsel %vm843, %v830, %v838
      %v846 = vsel %vm843, %v832, %v840
      %v847 = vsel %vm843, %v834, %v842
      %v848 = vsel %vm843, %v836, %v828
      %v849 = vsel %vm843, %v838, %v830
      %v850 = vsel %vm843, %v840, %v832
      %v851 = vsel %vm843, %v842, %v834
      %s852 = scalar_lea.vmem %s1, 5
      %v853 = vld [vmem:[%s852] ss:$8 sm:$0x3]
      %v855 = vlaneseq
      %v856 = vshrl.u32 %v855, 7
      %v857 = vsub.s32 0, %v856
      %v858 = vrot.slane %v853, %v857
      %v859 = vlaneseq
      %v860 = vshrl.u32 %v859, 7
      %v861 = vsub.s32 1, %v860
      %v862 = vrot.slane %v853, %v861
      %v865 = vmul.f32 %v844, %v858
      %v866 = vmul.f32 %v848, %v862
      %v867 = vmul.f32 %v845, %v858
      %v868 = vmul.f32 %v849, %v862
      %v869 = vmul.f32 %v846, %v858
      %v870 = vmul.f32 %v850, %v862
      %v871 = vmul.f32 %v847, %v858
      %v872 = vmul.f32 %v851, %v862
      %s873 = scalar_lea.vmem %s2, 80
      %v874 = vld [vmem:[%s873] sm:$0xf]
      %v875 = vld [vmem:[%s873 + $0x4] sm:$0xf]
      %v876 = vld [vmem:[%s873 + $0x8] sm:$0xf]
      %v877 = vld [vmem:[%s873 + $0xc] sm:$0xf]
      %v878 = vpack.c.bf16 %v867, %v865
      %v879 = vpack.c.bf16 %v868, %v866
      %v880 = vpack.c.bf16 %v871, %v869
      %v881 = vpack.c.bf16 %v872, %v870
      %v886 = vunpack.c.l.b16 %v874
      %v887 = vunpack.c.l.b16 %v875
      %v888 = vunpack.c.l.b16 %v876
      %v889 = vunpack.c.l.b16 %v877
      %v890 = vpack.c.b16 %v887, %v886
      %v891 = vpack.c.b16 %v889, %v888
      %v893 = vsel %vm348, %v890, 0
      %v896 = vsel %vm348, %v891, 0
      %898 = vmatprep.subr.bf16.mxu0 %v879
      %899 = vmatpush1.bf16.msra.mxu0 %v878
      %900 = vmatprep.subr.bf16.mxu0 %v881
      %901 = vmatpush1.bf16.msra.mxu0 %v880
      %902 = vmatprep.subr.bf16.mxu0 0
      %903 = vmatpush1.bf16.msra.mxu0 0
      %904 = vmatprep.subr.bf16.mxu0 0
      %905 = vmatpush1.bf16.msra.mxu0 0
      %906 = vmatprep.subr.bf16.mxu0 0
      %907 = vmatpush1.bf16.msra.mxu0 0
      %908 = vmatprep.subr.bf16.mxu0 0
      %909 = vmatpush1.bf16.msra.mxu0 0
      %910 = vmatprep.subr.bf16.mxu0 0
      %911 = vmatpush1.bf16.msra.mxu0 0
      %912 = vmatprep.subr.bf16.mxu0 0
      %913 = vmatpush1.bf16.msra.mxu0 0
      %914 = vmatprep.subr.bf16.mxu0 0
      %915 = vmatpush1.bf16.msra.mxu0 0
      %916 = vmatprep.subr.bf16.mxu0 0
      %917 = vmatpush1.bf16.msra.mxu0 0
      %918 = vmatprep.subr.bf16.mxu0 0
      %919 = vmatpush1.bf16.msra.mxu0 0
      %920 = vmatprep.subr.bf16.mxu0 0
      %921 = vmatpush1.bf16.msra.mxu0 0
      %922 = vmatprep.subr.bf16.mxu0 0
      %923 = vmatpush1.bf16.msra.mxu0 0
      %924 = vmatprep.subr.bf16.mxu0 0
      %925 = vmatpush1.bf16.msra.mxu0 0
      %926 = vmatprep.subr.bf16.mxu0 0
      %927 = vmatpush1.bf16.msra.mxu0 0
      %928 = vmatprep.subr.bf16.mxu0 0
      %929 = vmatpush1.bf16.msra.mxu0 0
      %930 = vmatprep.mubr.bf16.mxu0 0
      %931 = vmatmul.mubr.bf16.gmra.mrb[0].mxu0 %v893
      %v932 = vpop.f32.mrb[0].mxu0
      %v933 = vadd.f32 0.0, %v932
      %v934 = vpop.f32.mrb[0].mxu0
      %v935 = vadd.f32 0.0, %v934
      %v936 = vpop.f32.mrb[0].mxu0
      %v937 = vadd.f32 0.0, %v936
      %v938 = vpop.f32.mrb[0].mxu0
      %v939 = vadd.f32 0.0, %v938
      %940 = vmatprep.mubr.bf16.mxu0 0
      %941 = vmatmul.mubr.bf16.gmra.mrb[0].mxu0 %v896
      %v942 = vpop.f32.mrb[0].mxu0
      %v943 = vadd.f32 0.0, %v942
      %v944 = vpop.f32.mrb[0].mxu0
      %v945 = vadd.f32 0.0, %v944
      %v946 = vpop.f32.mrb[0].mxu0
      %v947 = vadd.f32 0.0, %v946
      %v948 = vpop.f32.mrb[0].mxu0
      %v949 = vadd.f32 0.0, %v948
      %950 = vdwg.mxu0
      %v951 = vadd.f32 %v819, %v933
      %v952 = vadd.f32 %v820, %v935
      %v953 = vadd.f32 %v821, %v937
      %v954 = vadd.f32 %v822, %v939
      %v955 = vadd.f32 %v823, %v943
      %v956 = vadd.f32 %v824, %v945
      %v957 = vadd.f32 %v825, %v947
      %v958 = vadd.f32 %v826, %v949
      %959 = vrot.lane.b32.xlu0 %v220, 113
      %v960 = vpop.permute.xlu0 %959
      %961 = vrot.lane.b32.xlu0 %v222, 113
      %v962 = vpop.permute.xlu0 %961
      %963 = vrot.lane.b32.xlu0 %v224, 113
      %v964 = vpop.permute.xlu0 %963
      %965 = vrot.lane.b32.xlu0 %v226, 113
      %v966 = vpop.permute.xlu0 %965
      %967 = vrot.lane.b32.xlu0 %v221, 113
      %v968 = vpop.permute.xlu0 %967
      %969 = vrot.lane.b32.xlu0 %v223, 113
      %v970 = vpop.permute.xlu0 %969
      %971 = vrot.lane.b32.xlu0 %v225, 113
      %v972 = vpop.permute.xlu0 %971
      %973 = vrot.lane.b32.xlu0 %v227, 113
      %v974 = vpop.permute.xlu0 %973
      %vm975 = vcmp.lt.s32.totalorder %v245, 113
      %v976 = vsel %vm975, %v960, %v968
      %v977 = vsel %vm975, %v962, %v970
      %v978 = vsel %vm975, %v964, %v972
      %v979 = vsel %vm975, %v966, %v974
      %v980 = vsel %vm975, %v968, %v960
      %v981 = vsel %vm975, %v970, %v962
      %v982 = vsel %vm975, %v972, %v964
      %v983 = vsel %vm975, %v974, %v966
      %s984 = scalar_lea.vmem %s1, 6
      %v985 = vld [vmem:[%s984] ss:$8 sm:$0x3]
      %v987 = vlaneseq
      %v988 = vshrl.u32 %v987, 7
      %v989 = vsub.s32 0, %v988
      %v990 = vrot.slane %v985, %v989
      %v991 = vlaneseq
      %v992 = vshrl.u32 %v991, 7
      %v993 = vsub.s32 1, %v992
      %v994 = vrot.slane %v985, %v993
      %v997 = vmul.f32 %v976, %v990
      %v998 = vmul.f32 %v980, %v994
      %v999 = vmul.f32 %v977, %v990
      %v1000 = vmul.f32 %v981, %v994
      %v1001 = vmul.f32 %v978, %v990
      %v1002 = vmul.f32 %v982, %v994
      %v1003 = vmul.f32 %v979, %v990
      %v1004 = vmul.f32 %v983, %v994
      %s1005 = scalar_lea.vmem %s2, 96
      %v1006 = vld [vmem:[%s1005] sm:$0xf]
      %v1007 = vld [vmem:[%s1005 + $0x4] sm:$0xf]
      %v1008 = vld [vmem:[%s1005 + $0x8] sm:$0xf]
      %v1009 = vld [vmem:[%s1005 + $0xc] sm:$0xf]
      %v1010 = vpack.c.bf16 %v999, %v997
      %v1011 = vpack.c.bf16 %v1000, %v998
      %v1012 = vpack.c.bf16 %v1003, %v1001
      %v1013 = vpack.c.bf16 %v1004, %v1002
      %v1018 = vunpack.c.l.b16 %v1006
      %v1019 = vunpack.c.l.b16 %v1007
      %v1020 = vunpack.c.l.b16 %v1008
      %v1021 = vunpack.c.l.b16 %v1009
      %v1022 = vpack.c.b16 %v1019, %v1018
      %v1023 = vpack.c.b16 %v1021, %v1020
      %v1025 = vsel %vm348, %v1022, 0
      %v1028 = vsel %vm348, %v1023, 0
      %1030 = vmatprep.subr.bf16.mxu0 %v1011
      %1031 = vmatpush1.bf16.msra.mxu0 %v1010
      %1032 = vmatprep.subr.bf16.mxu0 %v1013
      %1033 = vmatpush1.bf16.msra.mxu0 %v1012
      %1034 = vmatprep.subr.bf16.mxu0 0
      %1035 = vmatpush1.bf16.msra.mxu0 0
      %1036 = vmatprep.subr.bf16.mxu0 0
      %1037 = vmatpush1.bf16.msra.mxu0 0
      %1038 = vmatprep.subr.bf16.mxu0 0
      %1039 = vmatpush1.bf16.msra.mxu0 0
      %1040 = vmatprep.subr.bf16.mxu0 0
      %1041 = vmatpush1.bf16.msra.mxu0 0
      %1042 = vmatprep.subr.bf16.mxu0 0
      %1043 = vmatpush1.bf16.msra.mxu0 0
      %1044 = vmatprep.subr.bf16.mxu0 0
      %1045 = vmatpush1.bf16.msra.mxu0 0
      %1046 = vmatprep.subr.bf16.mxu0 0
      %1047 = vmatpush1.bf16.msra.mxu0 0
      %1048 = vmatprep.subr.bf16.mxu0 0
      %1049 = vmatpush1.bf16.msra.mxu0 0
      %1050 = vmatprep.subr.bf16.mxu0 0
      %1051 = vmatpush1.bf16.msra.mxu0 0
      %1052 = vmatprep.subr.bf16.mxu0 0
      %1053 = vmatpush1.bf16.msra.mxu0 0
      %1054 = vmatprep.subr.bf16.mxu0 0
      %1055 = vmatpush1.bf16.msra.mxu0 0
      %1056 = vmatprep.subr.bf16.mxu0 0
      %1057 = vmatpush1.bf16.msra.mxu0 0
      %1058 = vmatprep.subr.bf16.mxu0 0
      %1059 = vmatpush1.bf16.msra.mxu0 0
      %1060 = vmatprep.subr.bf16.mxu0 0
      %1061 = vmatpush1.bf16.msra.mxu0 0
      %1062 = vmatprep.mubr.bf16.mxu0 0
      %1063 = vmatmul.mubr.bf16.gmra.mrb[0].mxu0 %v1025
      %v1064 = vpop.f32.mrb[0].mxu0
      %v1065 = vadd.f32 0.0, %v1064
      %v1066 = vpop.f32.mrb[0].mxu0
      %v1067 = vadd.f32 0.0, %v1066
      %v1068 = vpop.f32.mrb[0].mxu0
      %v1069 = vadd.f32 0.0, %v1068
      %v1070 = vpop.f32.mrb[0].mxu0
      %v1071 = vadd.f32 0.0, %v1070
      %1072 = vmatprep.mubr.bf16.mxu0 0
      %1073 = vmatmul.mubr.bf16.gmra.mrb[0].mxu0 %v1028
      %v1074 = vpop.f32.mrb[0].mxu0
      %v1075 = vadd.f32 0.0, %v1074
      %v1076 = vpop.f32.mrb[0].mxu0
      %v1077 = vadd.f32 0.0, %v1076
      %v1078 = vpop.f32.mrb[0].mxu0
      %v1079 = vadd.f32 0.0, %v1078
      %v1080 = vpop.f32.mrb[0].mxu0
      %v1081 = vadd.f32 0.0, %v1080
      %1082 = vdwg.mxu0
      %v1083 = vadd.f32 %v951, %v1065
      %v1084 = vadd.f32 %v952, %v1067
      %v1085 = vadd.f32 %v953, %v1069
      %v1086 = vadd.f32 %v954, %v1071
      %v1087 = vadd.f32 %v955, %v1075
      %v1088 = vadd.f32 %v956, %v1077
      %v1089 = vadd.f32 %v957, %v1079
      %v1090 = vadd.f32 %v958, %v1081
      %1091 = vrot.lane.b32.xlu0 %v220, 112
      %v1092 = vpop.permute.xlu0 %1091
      %1093 = vrot.lane.b32.xlu0 %v222, 112
      %v1094 = vpop.permute.xlu0 %1093
      %1095 = vrot.lane.b32.xlu0 %v224, 112
      %v1096 = vpop.permute.xlu0 %1095
      %1097 = vrot.lane.b32.xlu0 %v226, 112
      %v1098 = vpop.permute.xlu0 %1097
      %1099 = vrot.lane.b32.xlu0 %v221, 112
      %v1100 = vpop.permute.xlu0 %1099
      %1101 = vrot.lane.b32.xlu0 %v223, 112
      %v1102 = vpop.permute.xlu0 %1101
      %1103 = vrot.lane.b32.xlu0 %v225, 112
      %v1104 = vpop.permute.xlu0 %1103
      %1105 = vrot.lane.b32.xlu0 %v227, 112
      %v1106 = vpop.permute.xlu0 %1105
      %vm1107 = vcmp.lt.s32.totalorder %v245, 112
      %v1108 = vsel %vm1107, %v1092, %v1100
      %v1109 = vsel %vm1107, %v1094, %v1102
      %v1110 = vsel %vm1107, %v1096, %v1104
      %v1111 = vsel %vm1107, %v1098, %v1106
      %v1112 = vsel %vm1107, %v1100, %v1092
      %v1113 = vsel %vm1107, %v1102, %v1094
      %v1114 = vsel %vm1107, %v1104, %v1096
      %v1115 = vsel %vm1107, %v1106, %v1098
      %s1116 = scalar_lea.vmem %s1, 7
      %v1117 = vld [vmem:[%s1116] ss:$8 sm:$0x3]
      %v1119 = vlaneseq
      %v1120 = vshrl.u32 %v1119, 7
      %v1121 = vsub.s32 0, %v1120
      %v1122 = vrot.slane %v1117, %v1121
      %v1123 = vlaneseq
      %v1124 = vshrl.u32 %v1123, 7
      %v1125 = vsub.s32 1, %v1124
      %v1126 = vrot.slane %v1117, %v1125
      %v1129 = vmul.f32 %v1108, %v1122
      %v1130 = vmul.f32 %v1112, %v1126
      %v1131 = vmul.f32 %v1109, %v1122
      %v1132 = vmul.f32 %v1113, %v1126
      %v1133 = vmul.f32 %v1110, %v1122
      %v1134 = vmul.f32 %v1114, %v1126
      %v1135 = vmul.f32 %v1111, %v1122
      %v1136 = vmul.f32 %v1115, %v1126
      %s1137 = scalar_lea.vmem %s2, 112
      %v1138 = vld [vmem:[%s1137] sm:$0xf]
      %v1139 = vld [vmem:[%s1137 + $0x4] sm:$0xf]
      %v1140 = vld [vmem:[%s1137 + $0x8] sm:$0xf]
      %v1141 = vld [vmem:[%s1137 + $0xc] sm:$0xf]
      %v1142 = vpack.c.bf16 %v1131, %v1129
      %v1143 = vpack.c.bf16 %v1132, %v1130
      %v1144 = vpack.c.bf16 %v1135, %v1133
      %v1145 = vpack.c.bf16 %v1136, %v1134
      %v1150 = vunpack.c.l.b16 %v1138
      %v1151 = vunpack.c.l.b16 %v1139
      %v1152 = vunpack.c.l.b16 %v1140
      %v1153 = vunpack.c.l.b16 %v1141
      %v1154 = vpack.c.b16 %v1151, %v1150
      %v1155 = vpack.c.b16 %v1153, %v1152
      %v1157 = vsel %vm348, %v1154, 0
      %v1160 = vsel %vm348, %v1155, 0
      %1162 = vmatprep.subr.bf16.mxu0 %v1143
      %1163 = vmatpush1.bf16.msra.mxu0 %v1142
      %1164 = vmatprep.subr.bf16.mxu0 %v1145
      %1165 = vmatpush1.bf16.msra.mxu0 %v1144
      %1166 = vmatprep.subr.bf16.mxu0 0
      %1167 = vmatpush1.bf16.msra.mxu0 0
      %1168 = vmatprep.subr.bf16.mxu0 0
      %1169 = vmatpush1.bf16.msra.mxu0 0
      %1170 = vmatprep.subr.bf16.mxu0 0
      %1171 = vmatpush1.bf16.msra.mxu0 0
      %1172 = vmatprep.subr.bf16.mxu0 0
      %1173 = vmatpush1.bf16.msra.mxu0 0
      %1174 = vmatprep.subr.bf16.mxu0 0
      %1175 = vmatpush1.bf16.msra.mxu0 0
      %1176 = vmatprep.subr.bf16.mxu0 0
      %1177 = vmatpush1.bf16.msra.mxu0 0
      %1178 = vmatprep.subr.bf16.mxu0 0
      %1179 = vmatpush1.bf16.msra.mxu0 0
      %1180 = vmatprep.subr.bf16.mxu0 0
      %1181 = vmatpush1.bf16.msra.mxu0 0
      %1182 = vmatprep.subr.bf16.mxu0 0
      %1183 = vmatpush1.bf16.msra.mxu0 0
      %1184 = vmatprep.subr.bf16.mxu0 0
      %1185 = vmatpush1.bf16.msra.mxu0 0
      %1186 = vmatprep.subr.bf16.mxu0 0
      %1187 = vmatpush1.bf16.msra.mxu0 0
      %1188 = vmatprep.subr.bf16.mxu0 0
      %1189 = vmatpush1.bf16.msra.mxu0 0
      %1190 = vmatprep.subr.bf16.mxu0 0
      %1191 = vmatpush1.bf16.msra.mxu0 0
      %1192 = vmatprep.subr.bf16.mxu0 0
      %1193 = vmatpush1.bf16.msra.mxu0 0
      %1194 = vmatprep.mubr.bf16.mxu0 0
      %1195 = vmatmul.mubr.bf16.gmra.mrb[0].mxu0 %v1157
      %v1196 = vpop.f32.mrb[0].mxu0
      %v1197 = vadd.f32 0.0, %v1196
      %v1198 = vpop.f32.mrb[0].mxu0
      %v1199 = vadd.f32 0.0, %v1198
      %v1200 = vpop.f32.mrb[0].mxu0
      %v1201 = vadd.f32 0.0, %v1200
      %v1202 = vpop.f32.mrb[0].mxu0
      %v1203 = vadd.f32 0.0, %v1202
      %1204 = vmatprep.mubr.bf16.mxu0 0
      %1205 = vmatmul.mubr.bf16.gmra.mrb[0].mxu0 %v1160
      %v1206 = vpop.f32.mrb[0].mxu0
      %v1207 = vadd.f32 0.0, %v1206
      %v1208 = vpop.f32.mrb[0].mxu0
      %v1209 = vadd.f32 0.0, %v1208
      %v1210 = vpop.f32.mrb[0].mxu0
      %v1211 = vadd.f32 0.0, %v1210
      %v1212 = vpop.f32.mrb[0].mxu0
      %v1213 = vadd.f32 0.0, %v1212
      %1214 = vdwg.mxu0
      %v1215 = vadd.f32 %v1083, %v1197
      %v1216 = vadd.f32 %v1084, %v1199
      %v1217 = vadd.f32 %v1085, %v1201
      %v1218 = vadd.f32 %v1086, %v1203
      %v1219 = vadd.f32 %v1087, %v1207
      %v1220 = vadd.f32 %v1088, %v1209
      %v1221 = vadd.f32 %v1089, %v1211
      %v1222 = vadd.f32 %v1090, %v1213
      %1223 = vrot.lane.b32.xlu0 %v220, 111
      %v1224 = vpop.permute.xlu0 %1223
      %1225 = vrot.lane.b32.xlu0 %v222, 111
      %v1226 = vpop.permute.xlu0 %1225
      %1227 = vrot.lane.b32.xlu0 %v224, 111
      %v1228 = vpop.permute.xlu0 %1227
      %1229 = vrot.lane.b32.xlu0 %v226, 111
      %v1230 = vpop.permute.xlu0 %1229
      %1231 = vrot.lane.b32.xlu0 %v221, 111
      %v1232 = vpop.permute.xlu0 %1231
      %1233 = vrot.lane.b32.xlu0 %v223, 111
      %v1234 = vpop.permute.xlu0 %1233
      %1235 = vrot.lane.b32.xlu0 %v225, 111
      %v1236 = vpop.permute.xlu0 %1235
      %1237 = vrot.lane.b32.xlu0 %v227, 111
      %v1238 = vpop.permute.xlu0 %1237
      %vm1239 = vcmp.lt.s32.totalorder %v245, 111
      %v1240 = vsel %vm1239, %v1224, %v1232
      %v1241 = vsel %vm1239, %v1226, %v1234
      %v1242 = vsel %vm1239, %v1228, %v1236
      %v1243 = vsel %vm1239, %v1230, %v1238
      %v1244 = vsel %vm1239, %v1232, %v1224
      %v1245 = vsel %vm1239, %v1234, %v1226
      %v1246 = vsel %vm1239, %v1236, %v1228
      %v1247 = vsel %vm1239, %v1238, %v1230
      %s1248 = scalar_lea.vmem %s1, 16
      %v1249 = vld [vmem:[%s1248] ss:$8 sm:$0x3]
      %v1251 = vlaneseq
      %v1252 = vshrl.u32 %v1251, 7
      %v1253 = vsub.s32 0, %v1252
      %v1254 = vrot.slane %v1249, %v1253
      %v1255 = vlaneseq
      %v1256 = vshrl.u32 %v1255, 7
      %v1257 = vsub.s32 1, %v1256
      %v1258 = vrot.slane %v1249, %v1257
      %v1261 = vmul.f32 %v1240, %v1254
      %v1262 = vmul.f32 %v1244, %v1258
      %v1263 = vmul.f32 %v1241, %v1254
      %v1264 = vmul.f32 %v1245, %v1258
      %v1265 = vmul.f32 %v1242, %v1254
      %v1266 = vmul.f32 %v1246, %v1258
      %v1267 = vmul.f32 %v1243, %v1254
      %v1268 = vmul.f32 %v1247, %v1258
      %s1269 = scalar_lea.vmem %s2, 128
      %v1270 = vld [vmem:[%s1269] sm:$0xf]
      %v1271 = vld [vmem:[%s1269 + $0x4] sm:$0xf]
      %v1272 = vld [vmem:[%s1269 + $0x8] sm:$0xf]
      %v1273 = vld [vmem:[%s1269 + $0xc] sm:$0xf]
      %v1274 = vpack.c.bf16 %v1263, %v1261
      %v1275 = vpack.c.bf16 %v1264, %v1262
      %v1276 = vpack.c.bf16 %v1267, %v1265
      %v1277 = vpack.c.bf16 %v1268, %v1266
      %v1282 = vunpack.c.l.b16 %v1270
      %v1283 = vunpack.c.l.b16 %v1271
      %v1284 = vunpack.c.l.b16 %v1272
      %v1285 = vunpack.c.l.b16 %v1273
      %v1286 = vpack.c.b16 %v1283, %v1282
      %v1287 = vpack.c.b16 %v1285, %v1284
      %v1289 = vsel %vm348, %v1286, 0
      %v1292 = vsel %vm348, %v1287, 0
      %1294 = vmatprep.subr.bf16.mxu0 %v1275
      %1295 = vmatpush1.bf16.msra.mxu0 %v1274
      %1296 = vmatprep.subr.bf16.mxu0 %v1277
      %1297 = vmatpush1.bf16.msra.mxu0 %v1276
      %1298 = vmatprep.subr.bf16.mxu0 0
      %1299 = vmatpush1.bf16.msra.mxu0 0
      %1300 = vmatprep.subr.bf16.mxu0 0
      %1301 = vmatpush1.bf16.msra.mxu0 0
      %1302 = vmatprep.subr.bf16.mxu0 0
      %1303 = vmatpush1.bf16.msra.mxu0 0
      %1304 = vmatprep.subr.bf16.mxu0 0
      %1305 = vmatpush1.bf16.msra.mxu0 0
      %1306 = vmatprep.subr.bf16.mxu0 0
      %1307 = vmatpush1.bf16.msra.mxu0 0
      %1308 = vmatprep.subr.bf16.mxu0 0
      %1309 = vmatpush1.bf16.msra.mxu0 0
      %1310 = vmatprep.subr.bf16.mxu0 0
      %1311 = vmatpush1.bf16.msra.mxu0 0
      %1312 = vmatprep.subr.bf16.mxu0 0
      %1313 = vmatpush1.bf16.msra.mxu0 0
      %1314 = vmatprep.subr.bf16.mxu0 0
      %1315 = vmatpush1.bf16.msra.mxu0 0
      %1316 = vmatprep.subr.bf16.mxu0 0
      %1317 = vmatpush1.bf16.msra.mxu0 0
      %1318 = vmatprep.subr.bf16.mxu0 0
      %1319 = vmatpush1.bf16.msra.mxu0 0
      %1320 = vmatprep.subr.bf16.mxu0 0
      %1321 = vmatpush1.bf16.msra.mxu0 0
      %1322 = vmatprep.subr.bf16.mxu0 0
      %1323 = vmatpush1.bf16.msra.mxu0 0
      %1324 = vmatprep.subr.bf16.mxu0 0
      %1325 = vmatpush1.bf16.msra.mxu0 0
      %1326 = vmatprep.mubr.bf16.mxu0 0
      %1327 = vmatmul.mubr.bf16.gmra.mrb[0].mxu0 %v1289
      %v1328 = vpop.f32.mrb[0].mxu0
      %v1329 = vadd.f32 0.0, %v1328
      %v1330 = vpop.f32.mrb[0].mxu0
      %v1331 = vadd.f32 0.0, %v1330
      %v1332 = vpop.f32.mrb[0].mxu0
      %v1333 = vadd.f32 0.0, %v1332
      %v1334 = vpop.f32.mrb[0].mxu0
      %v1335 = vadd.f32 0.0, %v1334
      %1336 = vmatprep.mubr.bf16.mxu0 0
      %1337 = vmatmul.mubr.bf16.gmra.mrb[0].mxu0 %v1292
      %v1338 = vpop.f32.mrb[0].mxu0
      %v1339 = vadd.f32 0.0, %v1338
      %v1340 = vpop.f32.mrb[0].mxu0
      %v1341 = vadd.f32 0.0, %v1340
      %v1342 = vpop.f32.mrb[0].mxu0
      %v1343 = vadd.f32 0.0, %v1342
      %v1344 = vpop.f32.mrb[0].mxu0
      %v1345 = vadd.f32 0.0, %v1344
      %1346 = vdwg.mxu0
      %v1347 = vadd.f32 %v1215, %v1329
      %v1348 = vadd.f32 %v1216, %v1331
      %v1349 = vadd.f32 %v1217, %v1333
      %v1350 = vadd.f32 %v1218, %v1335
      %v1351 = vadd.f32 %v1219, %v1339
      %v1352 = vadd.f32 %v1220, %v1341
      %v1353 = vadd.f32 %v1221, %v1343
      %v1354 = vadd.f32 %v1222, %v1345
      %v1355 = vpack.c.bf16 %v1349, %v1347
      %v1356 = vpack.c.bf16 %v1350, %v1348
      %v1357 = vpack.c.bf16 %v1353, %v1351
      %v1358 = vpack.c.bf16 %v1354, %v1352
      %v1363 = vunpack.c.l.b16 %v1355
      %v1364 = vunpack.c.l.b16 %v1356
      %v1365 = vunpack.c.h.b16 %v1355
      %v1366 = vunpack.c.h.b16 %v1356
      %v1367 = vunpack.c.l.b16 %v1357
      %v1368 = vunpack.c.l.b16 %v1358
      %v1369 = vunpack.c.h.b16 %v1357
      %v1370 = vunpack.c.h.b16 %v1358
      %v1371 = vpack.c.b16 %v1364, %v1363
      %v1372 = vpack.c.b16 %v1366, %v1365
      %v1373 = vpack.c.b16 %v1368, %v1367
      %v1374 = vpack.c.b16 %v1370, %v1369
      %1379 = vst [vmem:[%s205] sm:$0xff] %v1371
      %1380 = vst [vmem:[%s205 + $0x8] sm:$0xff] %v1372
      %1381 = vst [vmem:[%s205 + $0x10] sm:$0xff] %v1373
      %1382 = vst [vmem:[%s205 + $0x18] sm:$0xff] %v1374
      %v1383 = vadd.f32 %v1347, %v1348
      %1384 = vadd.xlane.f32.xlu0 %v1383
      %v1385 = vpop.xlane.xlu0 %1384
      %v1386 = vadd.f32 %v1349, %v1350
      %1387 = vadd.xlane.f32.xlu0 %v1386
      %v1388 = vpop.xlane.xlu0 %1387
      %v1389 = vadd.f32 %v1351, %v1352
      %1390 = vadd.xlane.f32.xlu0 %v1389
      %v1391 = vpop.xlane.xlu0 %1390
      %v1392 = vadd.f32 %v1353, %v1354
      %1393 = vadd.xlane.f32.xlu0 %v1392
      %v1394 = vpop.xlane.xlu0 %1393
      %v1395 = vadd.f32 %v1385, 0.0
      %v1396 = vadd.f32 %v1388, 0.0
      %v1397 = vadd.f32 %v1391, 0.0
      %v1398 = vadd.f32 %v1394, 0.0
      %v1399 = vmul.f32 %v1347, %v1347
      %v1400 = vmul.f32 %v1348, %v1348
      %v1401 = vmul.f32 %v1349, %v1349
      %v1402 = vmul.f32 %v1350, %v1350
      %v1403 = vmul.f32 %v1351, %v1351
      %v1404 = vmul.f32 %v1352, %v1352
      %v1405 = vmul.f32 %v1353, %v1353
      %v1406 = vmul.f32 %v1354, %v1354
      %v1407 = vadd.f32 %v1399, %v1400
      %1408 = vadd.xlane.f32.xlu0 %v1407
      %v1409 = vpop.xlane.xlu0 %1408
      %v1410 = vadd.f32 %v1401, %v1402
      %1411 = vadd.xlane.f32.xlu0 %v1410
      %v1412 = vpop.xlane.xlu0 %1411
      %v1413 = vadd.f32 %v1403, %v1404
      %1414 = vadd.xlane.f32.xlu0 %v1413
      %v1415 = vpop.xlane.xlu0 %1414
      %v1416 = vadd.f32 %v1405, %v1406
      %1417 = vadd.xlane.f32.xlu0 %v1416
      %v1418 = vpop.xlane.xlu0 %1417
      %v1419 = vadd.f32 %v1409, 0.0
      %v1420 = vadd.f32 %v1412, 0.0
      %v1421 = vadd.f32 %v1415, 0.0
      %v1422 = vadd.f32 %v1418, 0.0
      %vm1423 = vcmask 7168
      %1424 = vst.msk [vmem:[%s210] sm:$0xff] %vm1423, %v1395
      %1425 = vst.msk [vmem:[%s210 + $0x8] sm:$0xff] %vm1423, %v1396
      %1426 = vst.msk [vmem:[%s210 + $0x10] sm:$0xff] %vm1423, %v1397
      %1427 = vst.msk [vmem:[%s210 + $0x18] sm:$0xff] %vm1423, %v1398
      %1428 = vst.msk [vmem:[%s210 + $0x20] sm:$0xff] %vm1423, %v1419
      %1429 = vst.msk [vmem:[%s210 + $0x28] sm:$0xff] %vm1423, %v1420
      %1430 = vst.msk [vmem:[%s210 + $0x30] sm:$0xff] %vm1423, %v1421
      %1431 = vst.msk [vmem:[%s210 + $0x38] sm:$0xff] %vm1423, %v1422
      %p1432 = scmp.lt.s32.totalorder %s16, 1
      %s1433 = scalar_select %p1432, %s16, 1
      %s1434 = smul.addr %s1433, 8
      %s1435 = smul.addr %s1434, 4
      %s1436 = scalar_lea.vmem %s3, %s1435
      %p1437 = scmp.lt.s32.totalorder %s16, 1
      %s1438 = scalar_select %p1437, %s16, 1
      %s1439 = smul.addr %s1438, 8
      %s1440 = smul.addr %s1439, 8
      %s1441 = scalar_lea.vmem %s4, %s1440
      // Predicated region
      $region33: #{resblock_pallas.3} parent=31 // pred_check
        %p1442 = pneg %p102
      $region34: #{resblock_pallas.3} parent=31 // pred_check_branch
        %1444 = sbr.rel (%p1442) target = $region36
      $region35: #{resblock_pallas.3} parent=31 // pred_region
        _
      $region36: #{resblock_pallas.3} parent=31 // pred_fallthru
        _
      // Predicated region
      $region37: #{resblock_pallas.3} parent=31 // pred_check
        %p1445 = pneg %p128
      $region38: #{resblock_pallas.3} parent=31 // pred_check_branch
        %1447 = sbr.rel (%p1445) target = $region40
      $region39: #{resblock_pallas.3} parent=31 // pred_region
        _
      $region40: #{resblock_pallas.3} parent=31 // pred_fallthru
        _
    $region32: #{resblock_pallas.3} parent=5 // pred_fallthru
      _
    %p1448 = scmp.le.s32.totalorder 2, %s11
    // Predicated region
    $region41: #{resblock_pallas.3} parent=5 // pred_check
      %p1449 = pneg %p1448
    $region42: #{resblock_pallas.3} parent=5 // pred_check_branch
      %1451 = sbr.rel (%p1449) target = $region44
    $region43: #{resblock_pallas.3} parent=5 // pred_region
      %s1452 = ssub.s32 %s11, 2
      // Predicated region
      $region45: #{resblock_pallas.3} parent=43 // pred_check
        %p1453 = pneg %p108
      $region46: #{resblock_pallas.3} parent=43 // pred_check_branch
        %1455 = sbr.rel (%p1453) target = $region48
      $region47: #{resblock_pallas.3} parent=43 // pred_region
        %p1456 = scmp.lt.s32.totalorder %s17, 1
        %s1457 = scalar_select %p1456, %s17, 1
        %s1458 = smul.addr %s1457, 8
        %s1459 = smul.addr %s1458, 4
        %s1460 = scalar_lea.vmem %s3, %s1459
      $region48: #{resblock_pallas.3} parent=43 // pred_fallthru
        _
      // Predicated region
      $region49: #{resblock_pallas.3} parent=43 // pred_check
        %p1461 = pneg %p134
      $region50: #{resblock_pallas.3} parent=43 // pred_check_branch
        %1463 = sbr.rel (%p1461) target = $region52
      $region51: #{resblock_pallas.3} parent=43 // pred_region
        %p1464 = scmp.lt.s32.totalorder %s17, 1
        %s1465 = scalar_select %p1464, %s17, 1
        %s1466 = smul.addr %s1465, 8
        %s1467 = smul.addr %s1466, 8
        %s1468 = scalar_lea.vmem %s4, %s1467
      $region52: #{resblock_pallas.3} parent=43 // pred_fallthru
        _
    $region44: #{resblock_pallas.3} parent=5 // pred_fallthru
      _
  $region6: #{resblock_pallas.3} parent=0 // loop_footer
    %s15 = sadd.s32 1, %s11
  $region7: #{resblock_pallas.3} parent=0 // loop_footer_branch
    %10 = sbr.rel target = $region3
  $region8: #{resblock_pallas.3} parent=0 // loop_exit
    _

</llo_original>
